<compile_context>
chip_gen: v7x
topology: tpu7x:2x2x1
jax: 0.10.0
libtpu: 0.0.40
codegen_flags: <defaults>
</compile_context>

<pallas_src>
import functools

import jax
import jax.numpy as jnp
from jax.experimental import pallas as pl
from jax.experimental.pallas import tpu as pltpu


# --------------------------------------------------------------------------
# Fused kernel: per-group 1x1 offset conv (MXU) + bilinear gather, output
# emitted directly in the final NCHW-(rH, rW) flattening.
# --------------------------------------------------------------------------
def _adaptive_upsample_kernel(x_ref, w_ref, b_ref, sp_ref, kidx_ref,
                              wcf_ref, hcf_ref, o_ref, *, H, W, r, G, Cg):
    # x_ref:   (C, HW)        all input channels of this batch element
    # w_ref:   (2*r2, C)      this group's conv rows, pre-scaled by 0.25
    #                         (rows 0..r2-1 = x-offsets, r2..2r2-1 = y-offsets)
    # b_ref:   (2*r2, 1)      bias*0.25 + init_pos for this group
    # sp_ref:  (r2, HW) i32   source pixel h*W+w of output position m*HW+p
    # kidx_ref:(r2, HW) i32   sub-position k = i*r+j of output position m*HW+p
    # wcf_ref: (r2, HW) f32   base w coordinate of output position m*HW+p
    # hcf_ref: (r2, HW) f32   base h coordinate of output position m*HW+p
    # o_ref:   (Cg, r2*HW)    output columns already in (h*r+i)*(r*W)+(w*r+j)
    #                         order -> host reshape to (rH, rW) is a free view
    r2 = r * r
    HW = H * W
    g = pl.program_id(1)

    # Per-group 1x1 offset conv on the MXU (0.25 and init_pos already folded).
    off = (jnp.dot(w_ref[...], x_ref[...], preferred_element_type=jnp.float32)
           + b_ref[...])                                               # (2*r2, HW)

    # This group's feature slice (gather source); Cg is a multiple of 8.
    feat = x_ref[pl.ds(pl.multiple_of(g * Cg, 8), Cg), :]              # (Cg, HW)

    # Loop over the r^2 contiguous HW-wide chunks of the interleaved output.
    for m in range(r2):
        spm = sp_ref[m:m + 1, :]                                       # (1, HW)
        kim = kidx_ref[m:m + 1, :]                                     # (1, HW)

        # Spatially permute all 2*r2 offset rows into this chunk's output
        # order (one 8-sublane same-shape lane gather).
        offp = jnp.take_along_axis(off, jnp.broadcast_to(spm, off.shape),
                                   axis=1)                             # (2*r2, HW)
        # Per-lane sub-position select: pick offset row k(n).
        ox = offp[0:1, :]
        oy = offp[r2:r2 + 1, :]
        for k in range(1, r2):
            sel = kim == k
            ox = jnp.where(sel, offp[k:k + 1, :], ox)
            oy = jnp.where(sel, offp[r2 + k:r2 + k + 1, :], oy)

        # sample = base pixel + offset (exactly the align_corners=False
        # normalize/unnormalize round trip of the PyTorch module); border
        # padding == clamped corner indices (weights of coincident taps sum
        # to 1, so this is bit-for-bit the grid_sample 'border' result).
        ix = wcf_ref[m:m + 1, :] + ox
        iy = hcf_ref[m:m + 1, :] + oy
        x0 = jnp.floor(ix)
        y0 = jnp.floor(iy)
        wx1 = ix - x0
        wx0 = 1.0 - wx1
        wy1 = iy - y0
        wy0 = 1.0 - wy1
        x0i = x0.astype(jnp.int32)
        y0i = y0.astype(jnp.int32)
        x0c = jnp.clip(x0i, 0, W - 1)
        x1c = jnp.clip(x0i + 1, 0, W - 1)
        y0c = jnp.clip(y0i, 0, H - 1)
        y1c = jnp.clip(y0i + 1, 0, H - 1)
        taps = ((y0c * W + x0c, wy0 * wx0),
                (y0c * W + x1c, wy0 * wx1),
                (y1c * W + x0c, wy1 * wx0),
                (y1c * W + x1c, wy1 * wx1))

        acc = None
        for idx, wgt in taps:
            idx_b = jnp.broadcast_to(idx, (Cg, HW))
            t = jnp.take_along_axis(feat, idx_b, axis=1) * wgt
            acc = t if acc is None else acc + t

        # Contiguous, lane-dense, 128-aligned store (f32 accumulate, optional
        # bf16 writeback).
        o_ref[:, m * HW:(m + 1) * HW] = acc.astype(o_ref.dtype)


# --------------------------------------------------------------------------
# Host wrapper
# --------------------------------------------------------------------------
def adaptive_upsampling_forward(x, w, bias, init_pos, *, scale, groups,
                                out_dtype=None):
    B, C, H, W = x.shape
    r, G = scale, groups
    r2 = r * r
    HW = H * W
    N = r2 * HW
    Cg = C // G
    c_out = 2 * G * r2
    out_dtype = jnp.dtype(out_dtype or jnp.float32)
    out_bytes = out_dtype.itemsize

    assert C % G == 0 and w.shape == (c_out, C)
    assert HW % 128 == 0, "pad H*W to a multiple of 128 (lane alignment)"
    assert Cg % 8 == 0, "pad C/G to a multiple of 8 (sublane alignment)"

    # Features in (B, C, HW) layout (channels on sublanes, pixels on lanes).
    x3 = x.reshape(B, C, HW).astype(jnp.float32)

    # Per-group weight/bias: group g gets rows [x-offsets k=0..r2-1; y-offsets].
    # The 0.25 scale and init_pos are folded here (no in-kernel vmul/add rows).
    w4 = (w.astype(jnp.float32) * 0.25).reshape(2, G, r2, C)
    w_g = jnp.concatenate([w4[0], w4[1]], axis=1)                     # (G, 2*r2, C)
    bcomb = (bias.astype(jnp.float32) * 0.25
             + init_pos.astype(jnp.float32)).reshape(2, G, r2)
    b_g = jnp.concatenate([bcomb[0], bcomb[1]], axis=1)[..., None]    # (G, 2*r2, 1)

    # Static decode tables of the final NCHW-(rH, rW) flattening:
    #   n = (h*r + i)*(r*W) + w*r + j,  chunk m = n // HW, lane p = n % HW.
    n = jnp.arange(N, dtype=jnp.int32)
    h_ = n // (r2 * W)
    i_ = (n // (r * W)) % r
    w_ = (n // r) % W
    j_ = n % r
    sp = (h_ * W + w_).reshape(r2, HW)                                # int32
    kidx = (i_ * r + j_).reshape(r2, HW)                              # int32
    wcf = w_.astype(jnp.float32).reshape(r2, HW)
    hcf = h_.astype(jnp.float32).reshape(r2, HW)

    # VMEM budget from the actual block sizes (double-buffered inputs/outputs
    # + in-kernel temps), clamped to v7x's 64 MiB physical VMEM.
    x_blk = C * HW * 4
    out_blk = Cg * N * out_bytes
    const_blk = 4 * r2 * HW * 4 + 2 * 2 * r2 * (C + 1) * 4
    temps = (2 * 2 * r2 * HW + 14 * HW + 2 * Cg * HW) * 4
    est = 2 * (x_blk + out_blk) + 2 * const_blk + temps
    vmem_limit = int(min(64 * 2 ** 20, max(32 * 2 ** 20, 2 * est)))

    kernel = functools.partial(_adaptive_upsample_kernel,
                               H=H, W=W, r=r, G=G, Cg=Cg)
    out_flat = pl.pallas_call(
        kernel,
        out_shape=jax.ShapeDtypeStruct((B, C, N), out_dtype),
        grid=(B, G),
        in_specs=[
            # full feature block: constant index over g -> no re-DMA per group
            pl.BlockSpec((None, C, HW), lambda b, g: (b, 0, 0)),
            # per-group conv rows / bias (tiny, constant over b)
            pl.BlockSpec((None, 2 * r2, C), lambda b, g: (g, 0, 0)),
            pl.BlockSpec((None, 2 * r2, 1), lambda b, g: (g, 0, 0)),
            # static decode tables (constant over the whole grid)
            pl.BlockSpec((r2, HW), lambda b, g: (0, 0)),
            pl.BlockSpec((r2, HW), lambda b, g: (0, 0)),
            pl.BlockSpec((r2, HW), lambda b, g: (0, 0)),
            pl.BlockSpec((r2, HW), lambda b, g: (0, 0)),
        ],
        out_specs=pl.BlockSpec((None, Cg, N), lambda b, g: (b, g, 0)),
        compiler_params=pltpu.CompilerParams(
            dimension_semantics=("parallel", "parallel"),
            vmem_limit_bytes=vmem_limit),
    )(x3, w_g, b_g, sp, kidx, wcf, hcf)

    # Free view: the kernel already emitted the NCHW-(rH, rW) flattening.
    return out_flat.reshape(B, C, r * H, r * W)


# --------------------------------------------------------------------------
# init_pos buffer (matches the PyTorch _init_pos for style='lp')
# --------------------------------------------------------------------------
def make_init_pos(scale, groups):
    r = scale
    h = (jnp.arange(r, dtype=jnp.float32) - (r - 1) / 2.0) / r
    ip = jnp.zeros((2, groups, r, r), dtype=jnp.float32)
    ip = ip.at[0].set(h[None, None, :])   # x-offset depends on sub-column j
    ip = ip.at[1].set(h[None, :, None])   # y-offset depends on sub-row    i
    return ip.reshape(-1)                 # (2*groups*scale^2,)


# --------------------------------------------------------------------------
# Pure-JAX reference: literal translation of the PyTorch forward_lp/sample
# path (normalize -> pixel_shuffle -> grid_sample(align_corners=False,
# padding_mode='border')), independent of the kernel's closed-form shortcut.
# --------------------------------------------------------------------------
def _grid_sample_bilinear_border(inp, grid):
    # inp: (N, C, H, W); grid: (N, Ho, Wo, 2) normalized (x, y), align_corners=False
    Nb, C, H, W = inp.shape
    gx = grid[..., 0]
    gy = grid[..., 1]
    ix = ((gx + 1.0) * W - 1.0) / 2.0
    iy = ((gy + 1.0) * H - 1.0) / 2.0
    ix = jnp.clip(ix, 0.0, W - 1.0)       # padding_mode='border'
    iy = jnp.clip(iy, 0.0, H - 1.0)
    x0 = jnp.floor(ix)
    y0 = jnp.floor(iy)
    wx1 = ix - x0
    wx0 = 1.0 - wx1
    wy1 = iy - y0
    wy0 = 1.0 - wy1
    x0i = jnp.clip(x0.astype(jnp.int32), 0, W - 1)
    x1i = jnp.clip(x0.astype(jnp.int32) + 1, 0, W - 1)
    y0i = jnp.clip(y0.astype(jnp.int32), 0, H - 1)
    y1i = jnp.clip(y0.astype(jnp.int32) + 1, 0, H - 1)
    flat = inp.reshape(Nb, C, H * W)

    def gat(yi, xi):
        idx = (yi * W + xi).reshape(Nb, 1, -1)
        idx = jnp.broadcast_to(idx, (Nb, C, idx.shape[-1]))
        return jnp.take_along_axis(flat, idx, axis=2).reshape(
            Nb, C, yi.shape[1], yi.shape[2])

    return (gat(y0i, x0i) * (wy0 * wx0)[:, None]
            + gat(y0i, x1i) * (wy0 * wx1)[:, None]
            + gat(y1i, x0i) * (wy1 * wx0)[:, None]
            + gat(y1i, x1i) * (wy1 * wx1)[:, None])


def reference_forward(x, w, bias, init_pos, scale, groups):
    B, C, H, W = x.shape
    r, G = scale, groups
    r2 = r * r
    Cg = C // G
    # 1x1 conv + offset scaling
    offset = jnp.einsum('oc,bchw->bohw', w, x) + bias[None, :, None, None]
    offset = offset * 0.25 + init_pos[None, :, None, None]
    offset = offset.reshape(B, 2, G * r2, H, W)
    # coords (x = w+0.5, y = h+0.5), normalize to [-1, 1]
    coords_w = jnp.arange(W, dtype=x.dtype) + 0.5
    coords_h = jnp.arange(H, dtype=x.dtype) + 0.5
    cx, cy = jnp.meshgrid(coords_w, coords_h, indexing='xy')    # (H, W) each
    coords = jnp.stack([cx, cy]).astype(x.dtype)                # (2, H, W)
    normalizer = jnp.array([W, H], dtype=x.dtype).reshape(1, 2, 1, 1, 1)
    coords = 2.0 * (coords[None, :, None, :, :] + offset) / normalizer - 1.0
    # F.pixel_shuffle on the (B, 2*G*r2, H, W) view
    coords = coords.reshape(B, 2 * G, r, r, H, W)
    coords = coords.transpose(0, 1, 4, 2, 5, 3).reshape(B, 2, G, r * H, r * W)
    grid = coords.transpose(0, 2, 3, 4, 1).reshape(B * G, r * H, r * W, 2)
    feat = x.reshape(B * G, Cg, H, W)
    out = _grid_sample_bilinear_border(feat, grid)
    return out.reshape(B, C, r * H, r * W)


if __name__ == "__main__":
    # Non-square spatial dims; C=64, groups=4 -> Cg=16 (native tiles for both
    # f32 and bf16 output blocks), H*W = 128 lanes.
    B, C, H, W = 2, 64, 8, 16
    scale, groups = 2, 4

    key = jax.random.PRNGKey(0)
    kx, kw = jax.random.split(key)
    x = jax.random.normal(kx, (B, C, H, W), dtype=jnp.float32)

    c_out = 2 * groups * scale * scale
    # nn.Conv2d(in, out, 1): weight (out, in) ~ N(0, 0.001), bias = 0
    w = jax.random.normal(kw, (c_out, C), dtype=jnp.float32) * 1e-3
    bias = jnp.zeros((c_out,), dtype=jnp.float32)
    init_pos = make_init_pos(scale, groups)

    ref = reference_forward(x, w, bias, init_pos, scale, groups)

    # f32 path (module semantics), tight tolerance.
    out = adaptive_upsampling_forward(x, w, bias, init_pos,
                                      scale=scale, groups=groups)
    out = jax.block_until_ready(out)
    assert out.shape == (B, C, H * scale, W * scale)
    assert out.dtype == jnp.float32
    max_err = float(jnp.max(jnp.abs(out - ref)))
    assert bool(jnp.allclose(out, ref, atol=2e-5, rtol=1e-5)), max_err

    # bf16 writeback variant (halves the dominant HBM traffic on v6e/v7x).
    out_bf16 = adaptive_upsampling_forward(x, w, bias, init_pos,
                                           scale=scale, groups=groups,
                                           out_dtype=jnp.bfloat16)
    out_bf16 = jax.block_until_ready(out_bf16)
    assert out_bf16.dtype == jnp.bfloat16
    assert bool(jnp.allclose(out_bf16.astype(jnp.float32), ref,
                             atol=5e-2, rtol=5e-2))

    print("KERNEL_OK")
</pallas_src>

<mosaic_0001>
module attributes {stable_mosaic.version = 11 : i64} {
  func.func @_adaptive_upsample_kernel(%arg0: i32, %arg1: i32, %arg2: memref<1x64x128xf32, #tpu.memory_space<vmem>>, %arg3: memref<1x8x64xf32, #tpu.memory_space<vmem>>, %arg4: memref<1x8x1xf32, #tpu.memory_space<vmem>>, %arg5: memref<4x128xi32, #tpu.memory_space<vmem>>, %arg6: memref<4x128xi32, #tpu.memory_space<vmem>>, %arg7: memref<4x128xf32, #tpu.memory_space<vmem>>, %arg8: memref<4x128xf32, #tpu.memory_space<vmem>>, %arg9: memref<1x16x512xf32, #tpu.memory_space<vmem>>) attributes {dimension_semantics = [#tpu.dimension_semantics<parallel>, #tpu.dimension_semantics<parallel>], iteration_bounds = array<i64: 2, 4>, scalar_prefetch = 0 : i64, scratch_operands = 0 : i64, tpu.core_type = #tpu.core_type<tc>, window_params = [{transform_indices = @transform_0, window_bounds = array<i64: 1, 64, 128>}, {transform_indices = @transform_1, window_bounds = array<i64: 1, 8, 64>}, {transform_indices = @transform_2, window_bounds = array<i64: 1, 8, 1>}, {pipeline_mode = #tpu.pipeline_mode<synchronous>, transform_indices = @transform_3, window_bounds = array<i64: 4, 128>}, {pipeline_mode = #tpu.pipeline_mode<synchronous>, transform_indices = @transform_4, window_bounds = array<i64: 4, 128>}, {pipeline_mode = #tpu.pipeline_mode<synchronous>, transform_indices = @transform_5, window_bounds = array<i64: 4, 128>}, {pipeline_mode = #tpu.pipeline_mode<synchronous>, transform_indices = @transform_6, window_bounds = array<i64: 4, 128>}, {transform_indices = @transform_7, window_bounds = array<i64: 1, 16, 512>}]} {
    %c0 = arith.constant 0 : index
    %c0_0 = arith.constant 0 : index
    %c0_1 = arith.constant 0 : index
    %0 = vector.load %arg3[%c0, %c0_0, %c0_1] : memref<1x8x64xf32, #tpu.memory_space<vmem>>, vector<1x8x64xf32>
    %1 = vector.shape_cast %0 : vector<1x8x64xf32> to vector<8x64xf32>
    %c0_2 = arith.constant 0 : index
    %c0_3 = arith.constant 0 : index
    %c0_4 = arith.constant 0 : index
    %2 = vector.load %arg2[%c0_2, %c0_3, %c0_4] : memref<1x64x128xf32, #tpu.memory_space<vmem>>, vector<1x64x128xf32>
    %3 = vector.shape_cast %2 : vector<1x64x128xf32> to vector<64x128xf32>
    %cst = arith.constant dense<0.000000e+00> : vector<8x128xf32>
    %4 = tpu.matmul %1, %3, %cst {dimension_numbers = #tpu.dot_dimension_numbers<[1], [0], [0], [1], [0, 0, 1, 1], [], []>} : vector<8x64xf32>, vector<64x128xf32>, vector<8x128xf32> -> vector<8x128xf32>
    %c0_5 = arith.constant 0 : index
    %c0_6 = arith.constant 0 : index
    %c0_7 = arith.constant 0 : index
    %5 = vector.load %arg4[%c0_5, %c0_6, %c0_7] : memref<1x8x1xf32, #tpu.memory_space<vmem>>, vector<1x8x1xf32>
    %6 = vector.shape_cast %5 : vector<1x8x1xf32> to vector<8x1xf32>
    %7 = vector.broadcast %6 : vector<8x1xf32> to vector<8x128xf32>
    %8 = arith.addf %4, %7 : vector<8x128xf32>
    %c16_i32 = arith.constant 16 : i32
    %9 = arith.muli %arg1, %c16_i32 : i32
    %10 = tpu.assume_multiple %9, 8 : i32
    %c0_8 = arith.constant 0 : index
    %11 = arith.index_cast %10 : i32 to index
    %c0_9 = arith.constant 0 : index
    %12 = vector.load %arg2[%c0_8, %11, %c0_9] : memref<1x64x128xf32, #tpu.memory_space<vmem>>, vector<1x16x128xf32>
    %13 = vector.shape_cast %12 : vector<1x16x128xf32> to vector<16x128xf32>
    %c0_10 = arith.constant 0 : index
    %c0_11 = arith.constant 0 : index
    %14 = vector.load %arg5[%c0_10, %c0_11] : memref<4x128xi32, #tpu.memory_space<vmem>>, vector<1x128xi32>
    %c0_12 = arith.constant 0 : index
    %c0_13 = arith.constant 0 : index
    %15 = vector.load %arg6[%c0_12, %c0_13] : memref<4x128xi32, #tpu.memory_space<vmem>>, vector<1x128xi32>
    %16 = vector.shape_cast %14 : vector<1x128xi32> to vector<1x128xi32>
    %17 = vector.broadcast %16 : vector<1x128xi32> to vector<8x128xi32>
    %c0_i32 = arith.constant 0 : i32
    %18 = vector.broadcast %c0_i32 : i32 to vector<8x128xi32>
    %19 = arith.cmpi slt, %17, %18 : vector<8x128xi32>
    %c128_i32 = arith.constant 128 : i32
    %20 = vector.broadcast %c128_i32 : i32 to vector<8x128xi32>
    %21 = arith.addi %17, %20 : vector<8x128xi32>
    %22 = arith.select %19, %21, %17 : vector<8x128xi1>, vector<8x128xi32>
    %23 = vector.shape_cast %22 : vector<8x128xi32> to vector<8x128x1xi32>
    %24 = vector.shape_cast %23 : vector<8x128x1xi32> to vector<8x128xi32>
    %25 = tpu.dynamic_gather %8[%24] in [1] : vector<8x128xf32>, vector<8x128xi32> -> vector<8x128xf32>
    %26 = vector.extract_strided_slice %25 {offsets = [0, 0], sizes = [1, 128], strides = [1, 1]} : vector<8x128xf32> to vector<1x128xf32>
    %27 = vector.extract_strided_slice %25 {offsets = [4, 0], sizes = [1, 128], strides = [1, 1]} : vector<8x128xf32> to vector<1x128xf32>
    %c1_i32 = arith.constant 1 : i32
    %28 = vector.broadcast %c1_i32 : i32 to vector<1x128xi32>
    %29 = arith.cmpi eq, %15, %28 : vector<1x128xi32>
    %30 = vector.extract_strided_slice %25 {offsets = [1, 0], sizes = [1, 128], strides = [1, 1]} : vector<8x128xf32> to vector<1x128xf32>
    %31 = arith.select %29, %30, %26 : vector<1x128xi1>, vector<1x128xf32>
    %32 = vector.extract_strided_slice %25 {offsets = [5, 0], sizes = [1, 128], strides = [1, 1]} : vector<8x128xf32> to vector<1x128xf32>
    %33 = arith.select %29, %32, %27 : vector<1x128xi1>, vector<1x128xf32>
    %c2_i32 = arith.constant 2 : i32
    %34 = vector.broadcast %c2_i32 : i32 to vector<1x128xi32>
    %35 = arith.cmpi eq, %15, %34 : vector<1x128xi32>
    %36 = vector.extract_strided_slice %25 {offsets = [2, 0], sizes = [1, 128], strides = [1, 1]} : vector<8x128xf32> to vector<1x128xf32>
    %37 = arith.select %35, %36, %31 : vector<1x128xi1>, vector<1x128xf32>
    %38 = vector.extract_strided_slice %25 {offsets = [6, 0], sizes = [1, 128], strides = [1, 1]} : vector<8x128xf32> to vector<1x128xf32>
    %39 = arith.select %35, %38, %33 : vector<1x128xi1>, vector<1x128xf32>
    %c3_i32 = arith.constant 3 : i32
    %40 = vector.broadcast %c3_i32 : i32 to vector<1x128xi32>
    %41 = arith.cmpi eq, %15, %40 : vector<1x128xi32>
    %42 = vector.extract_strided_slice %25 {offsets = [3, 0], sizes = [1, 128], strides = [1, 1]} : vector<8x128xf32> to vector<1x128xf32>
    %43 = arith.select %41, %42, %37 : vector<1x128xi1>, vector<1x128xf32>
    %44 = vector.extract_strided_slice %25 {offsets = [7, 0], sizes = [1, 128], strides = [1, 1]} : vector<8x128xf32> to vector<1x128xf32>
    %45 = arith.select %41, %44, %39 : vector<1x128xi1>, vector<1x128xf32>
    %c0_14 = arith.constant 0 : index
    %c0_15 = arith.constant 0 : index
    %46 = vector.load %arg7[%c0_14, %c0_15] : memref<4x128xf32, #tpu.memory_space<vmem>>, vector<1x128xf32>
    %47 = arith.addf %46, %43 : vector<1x128xf32>
    %c0_16 = arith.constant 0 : index
    %c0_17 = arith.constant 0 : index
    %48 = vector.load %arg8[%c0_16, %c0_17] : memref<4x128xf32, #tpu.memory_space<vmem>>, vector<1x128xf32>
    %49 = arith.addf %48, %45 : vector<1x128xf32>
    %50 = math.floor %47 : vector<1x128xf32>
    %51 = math.floor %49 : vector<1x128xf32>
    %52 = arith.subf %47, %50 : vector<1x128xf32>
    %cst_18 = arith.constant 1.000000e+00 : f32
    %53 = vector.broadcast %cst_18 : f32 to vector<1x128xf32>
    %54 = arith.subf %53, %52 : vector<1x128xf32>
    %55 = arith.subf %49, %51 : vector<1x128xf32>
    %cst_19 = arith.constant 1.000000e+00 : f32
    %56 = vector.broadcast %cst_19 : f32 to vector<1x128xf32>
    %57 = arith.subf %56, %55 : vector<1x128xf32>
    %58 = arith.fptosi %50 : vector<1x128xf32> to vector<1x128xi32>
    %59 = arith.fptosi %51 : vector<1x128xf32> to vector<1x128xi32>
    %c0_i32_20 = arith.constant 0 : i32
    %c15_i32 = arith.constant 15 : i32
    %60 = vector.broadcast %c0_i32_20 : i32 to vector<1x128xi32>
    %61 = arith.maxsi %60, %58 : vector<1x128xi32>
    %62 = vector.broadcast %c15_i32 : i32 to vector<1x128xi32>
    %63 = arith.minsi %62, %61 : vector<1x128xi32>
    %c1_i32_21 = arith.constant 1 : i32
    %64 = vector.broadcast %c1_i32_21 : i32 to vector<1x128xi32>
    %65 = arith.addi %58, %64 : vector<1x128xi32>
    %c0_i32_22 = arith.constant 0 : i32
    %c15_i32_23 = arith.constant 15 : i32
    %66 = vector.broadcast %c0_i32_22 : i32 to vector<1x128xi32>
    %67 = arith.maxsi %66, %65 : vector<1x128xi32>
    %68 = vector.broadcast %c15_i32_23 : i32 to vector<1x128xi32>
    %69 = arith.minsi %68, %67 : vector<1x128xi32>
    %c0_i32_24 = arith.constant 0 : i32
    %c7_i32 = arith.constant 7 : i32
    %70 = vector.broadcast %c0_i32_24 : i32 to vector<1x128xi32>
    %71 = arith.maxsi %70, %59 : vector<1x128xi32>
    %72 = vector.broadcast %c7_i32 : i32 to vector<1x128xi32>
    %73 = arith.minsi %72, %71 : vector<1x128xi32>
    %c1_i32_25 = arith.constant 1 : i32
    %74 = vector.broadcast %c1_i32_25 : i32 to vector<1x128xi32>
    %75 = arith.addi %59, %74 : vector<1x128xi32>
    %c0_i32_26 = arith.constant 0 : i32
    %c7_i32_27 = arith.constant 7 : i32
    %76 = vector.broadcast %c0_i32_26 : i32 to vector<1x128xi32>
    %77 = arith.maxsi %76, %75 : vector<1x128xi32>
    %78 = vector.broadcast %c7_i32_27 : i32 to vector<1x128xi32>
    %79 = arith.minsi %78, %77 : vector<1x128xi32>
    %c16_i32_28 = arith.constant 16 : i32
    %80 = vector.broadcast %c16_i32_28 : i32 to vector<1x128xi32>
    %81 = arith.muli %73, %80 : vector<1x128xi32>
    %82 = arith.addi %81, %63 : vector<1x128xi32>
    %83 = arith.mulf %57, %54 : vector<1x128xf32>
    %c16_i32_29 = arith.constant 16 : i32
    %84 = vector.broadcast %c16_i32_29 : i32 to vector<1x128xi32>
    %85 = arith.muli %73, %84 : vector<1x128xi32>
    %86 = arith.addi %85, %69 : vector<1x128xi32>
    %87 = arith.mulf %57, %52 : vector<1x128xf32>
    %c16_i32_30 = arith.constant 16 : i32
    %88 = vector.broadcast %c16_i32_30 : i32 to vector<1x128xi32>
    %89 = arith.muli %79, %88 : vector<1x128xi32>
    %90 = arith.addi %89, %63 : vector<1x128xi32>
    %91 = arith.mulf %55, %54 : vector<1x128xf32>
    %c16_i32_31 = arith.constant 16 : i32
    %92 = vector.broadcast %c16_i32_31 : i32 to vector<1x128xi32>
    %93 = arith.muli %79, %92 : vector<1x128xi32>
    %94 = arith.addi %93, %69 : vector<1x128xi32>
    %95 = arith.mulf %55, %52 : vector<1x128xf32>
    %96 = vector.shape_cast %82 : vector<1x128xi32> to vector<1x128xi32>
    %97 = vector.broadcast %96 : vector<1x128xi32> to vector<16x128xi32>
    %c0_i32_32 = arith.constant 0 : i32
    %98 = vector.broadcast %c0_i32_32 : i32 to vector<16x128xi32>
    %99 = arith.cmpi slt, %97, %98 : vector<16x128xi32>
    %c128_i32_33 = arith.constant 128 : i32
    %100 = vector.broadcast %c128_i32_33 : i32 to vector<16x128xi32>
    %101 = arith.addi %97, %100 : vector<16x128xi32>
    %102 = arith.select %99, %101, %97 : vector<16x128xi1>, vector<16x128xi32>
    %103 = vector.shape_cast %102 : vector<16x128xi32> to vector<16x128x1xi32>
    %104 = vector.shape_cast %103 : vector<16x128x1xi32> to vector<16x128xi32>
    %105 = tpu.dynamic_gather %13[%104] in [1] : vector<16x128xf32>, vector<16x128xi32> -> vector<16x128xf32>
    %106 = vector.broadcast %83 : vector<1x128xf32> to vector<16x128xf32>
    %107 = arith.mulf %105, %106 : vector<16x128xf32>
    %108 = vector.shape_cast %86 : vector<1x128xi32> to vector<1x128xi32>
    %109 = vector.broadcast %108 : vector<1x128xi32> to vector<16x128xi32>
    %c0_i32_34 = arith.constant 0 : i32
    %110 = vector.broadcast %c0_i32_34 : i32 to vector<16x128xi32>
    %111 = arith.cmpi slt, %109, %110 : vector<16x128xi32>
    %c128_i32_35 = arith.constant 128 : i32
    %112 = vector.broadcast %c128_i32_35 : i32 to vector<16x128xi32>
    %113 = arith.addi %109, %112 : vector<16x128xi32>
    %114 = arith.select %111, %113, %109 : vector<16x128xi1>, vector<16x128xi32>
    %115 = vector.shape_cast %114 : vector<16x128xi32> to vector<16x128x1xi32>
    %116 = vector.shape_cast %115 : vector<16x128x1xi32> to vector<16x128xi32>
    %117 = tpu.dynamic_gather %13[%116] in [1] : vector<16x128xf32>, vector<16x128xi32> -> vector<16x128xf32>
    %118 = vector.broadcast %87 : vector<1x128xf32> to vector<16x128xf32>
    %119 = arith.mulf %117, %118 : vector<16x128xf32>
    %120 = arith.addf %107, %119 : vector<16x128xf32>
    %121 = vector.shape_cast %90 : vector<1x128xi32> to vector<1x128xi32>
    %122 = vector.broadcast %121 : vector<1x128xi32> to vector<16x128xi32>
    %c0_i32_36 = arith.constant 0 : i32
    %123 = vector.broadcast %c0_i32_36 : i32 to vector<16x128xi32>
    %124 = arith.cmpi slt, %122, %123 : vector<16x128xi32>
    %c128_i32_37 = arith.constant 128 : i32
    %125 = vector.broadcast %c128_i32_37 : i32 to vector<16x128xi32>
    %126 = arith.addi %122, %125 : vector<16x128xi32>
    %127 = arith.select %124, %126, %122 : vector<16x128xi1>, vector<16x128xi32>
    %128 = vector.shape_cast %127 : vector<16x128xi32> to vector<16x128x1xi32>
    %129 = vector.shape_cast %128 : vector<16x128x1xi32> to vector<16x128xi32>
    %130 = tpu.dynamic_gather %13[%129] in [1] : vector<16x128xf32>, vector<16x128xi32> -> vector<16x128xf32>
    %131 = vector.broadcast %91 : vector<1x128xf32> to vector<16x128xf32>
    %132 = arith.mulf %130, %131 : vector<16x128xf32>
    %133 = arith.addf %120, %132 : vector<16x128xf32>
    %134 = vector.shape_cast %94 : vector<1x128xi32> to vector<1x128xi32>
    %135 = vector.broadcast %134 : vector<1x128xi32> to vector<16x128xi32>
    %c0_i32_38 = arith.constant 0 : i32
    %136 = vector.broadcast %c0_i32_38 : i32 to vector<16x128xi32>
    %137 = arith.cmpi slt, %135, %136 : vector<16x128xi32>
    %c128_i32_39 = arith.constant 128 : i32
    %138 = vector.broadcast %c128_i32_39 : i32 to vector<16x128xi32>
    %139 = arith.addi %135, %138 : vector<16x128xi32>
    %140 = arith.select %137, %139, %135 : vector<16x128xi1>, vector<16x128xi32>
    %141 = vector.shape_cast %140 : vector<16x128xi32> to vector<16x128x1xi32>
    %142 = vector.shape_cast %141 : vector<16x128x1xi32> to vector<16x128xi32>
    %143 = tpu.dynamic_gather %13[%142] in [1] : vector<16x128xf32>, vector<16x128xi32> -> vector<16x128xf32>
    %144 = vector.broadcast %95 : vector<1x128xf32> to vector<16x128xf32>
    %145 = arith.mulf %143, %144 : vector<16x128xf32>
    %146 = arith.addf %133, %145 : vector<16x128xf32>
    %c0_40 = arith.constant 0 : index
    %c0_41 = arith.constant 0 : index
    %c0_42 = arith.constant 0 : index
    %147 = vector.load %arg9[%c0_40, %c0_41, %c0_42] : memref<1x16x512xf32, #tpu.memory_space<vmem>>, vector<1x16x128xf32>
    %148 = vector.shape_cast %147 : vector<1x16x128xf32> to vector<16x128xf32>
    %149 = vector.shape_cast %146 : vector<16x128xf32> to vector<1x16x128xf32>
    tpu.vector_store %arg9[%c0_40, %c0_41, %c0_42], %149 {strides = array<i32>} : memref<1x16x512xf32, #tpu.memory_space<vmem>>, vector<1x16x128xf32>,
    %c1 = arith.constant 1 : index
    %c0_43 = arith.constant 0 : index
    %150 = vector.load %arg5[%c1, %c0_43] : memref<4x128xi32, #tpu.memory_space<vmem>>, vector<1x128xi32>
    %c1_44 = arith.constant 1 : index
    %c0_45 = arith.constant 0 : index
    %151 = vector.load %arg6[%c1_44, %c0_45] : memref<4x128xi32, #tpu.memory_space<vmem>>, vector<1x128xi32>
    %152 = vector.shape_cast %150 : vector<1x128xi32> to vector<1x128xi32>
    %153 = vector.broadcast %152 : vector<1x128xi32> to vector<8x128xi32>
    %c0_i32_46 = arith.constant 0 : i32
    %154 = vector.broadcast %c0_i32_46 : i32 to vector<8x128xi32>
    %155 = arith.cmpi slt, %153, %154 : vector<8x128xi32>
    %c128_i32_47 = arith.constant 128 : i32
    %156 = vector.broadcast %c128_i32_47 : i32 to vector<8x128xi32>
    %157 = arith.addi %153, %156 : vector<8x128xi32>
    %158 = arith.select %155, %157, %153 : vector<8x128xi1>, vector<8x128xi32>
    %159 = vector.shape_cast %158 : vector<8x128xi32> to vector<8x128x1xi32>
    %160 = vector.shape_cast %159 : vector<8x128x1xi32> to vector<8x128xi32>
    %161 = tpu.dynamic_gather %8[%160] in [1] : vector<8x128xf32>, vector<8x128xi32> -> vector<8x128xf32>
    %162 = vector.extract_strided_slice %161 {offsets = [0, 0], sizes = [1, 128], strides = [1, 1]} : vector<8x128xf32> to vector<1x128xf32>
    %163 = vector.extract_strided_slice %161 {offsets = [4, 0], sizes = [1, 128], strides = [1, 1]} : vector<8x128xf32> to vector<1x128xf32>
    %c1_i32_48 = arith.constant 1 : i32
    %164 = vector.broadcast %c1_i32_48 : i32 to vector<1x128xi32>
    %165 = arith.cmpi eq, %151, %164 : vector<1x128xi32>
    %166 = vector.extract_strided_slice %161 {offsets = [1, 0], sizes = [1, 128], strides = [1, 1]} : vector<8x128xf32> to vector<1x128xf32>
    %167 = arith.select %165, %166, %162 : vector<1x128xi1>, vector<1x128xf32>
    %168 = vector.extract_strided_slice %161 {offsets = [5, 0], sizes = [1, 128], strides = [1, 1]} : vector<8x128xf32> to vector<1x128xf32>
    %169 = arith.select %165, %168, %163 : vector<1x128xi1>, vector<1x128xf32>
    %c2_i32_49 = arith.constant 2 : i32
    %170 = vector.broadcast %c2_i32_49 : i32 to vector<1x128xi32>
    %171 = arith.cmpi eq, %151, %170 : vector<1x128xi32>
    %172 = vector.extract_strided_slice %161 {offsets = [2, 0], sizes = [1, 128], strides = [1, 1]} : vector<8x128xf32> to vector<1x128xf32>
    %173 = arith.select %171, %172, %167 : vector<1x128xi1>, vector<1x128xf32>
    %174 = vector.extract_strided_slice %161 {offsets = [6, 0], sizes = [1, 128], strides = [1, 1]} : vector<8x128xf32> to vector<1x128xf32>
    %175 = arith.select %171, %174, %169 : vector<1x128xi1>, vector<1x128xf32>
    %c3_i32_50 = arith.constant 3 : i32
    %176 = vector.broadcast %c3_i32_50 : i32 to vector<1x128xi32>
    %177 = arith.cmpi eq, %151, %176 : vector<1x128xi32>
    %178 = vector.extract_strided_slice %161 {offsets = [3, 0], sizes = [1, 128], strides = [1, 1]} : vector<8x128xf32> to vector<1x128xf32>
    %179 = arith.select %177, %178, %173 : vector<1x128xi1>, vector<1x128xf32>
    %180 = vector.extract_strided_slice %161 {offsets = [7, 0], sizes = [1, 128], strides = [1, 1]} : vector<8x128xf32> to vector<1x128xf32>
    %181 = arith.select %177, %180, %175 : vector<1x128xi1>, vector<1x128xf32>
    %c1_51 = arith.constant 1 : index
    %c0_52 = arith.constant 0 : index
    %182 = vector.load %arg7[%c1_51, %c0_52] : memref<4x128xf32, #tpu.memory_space<vmem>>, vector<1x128xf32>
    %183 = arith.addf %182, %179 : vector<1x128xf32>
    %c1_53 = arith.constant 1 : index
    %c0_54 = arith.constant 0 : index
    %184 = vector.load %arg8[%c1_53, %c0_54] : memref<4x128xf32, #tpu.memory_space<vmem>>, vector<1x128xf32>
    %185 = arith.addf %184, %181 : vector<1x128xf32>
    %186 = math.floor %183 : vector<1x128xf32>
    %187 = math.floor %185 : vector<1x128xf32>
    %188 = arith.subf %183, %186 : vector<1x128xf32>
    %cst_55 = arith.constant 1.000000e+00 : f32
    %189 = vector.broadcast %cst_55 : f32 to vector<1x128xf32>
    %190 = arith.subf %189, %188 : vector<1x128xf32>
    %191 = arith.subf %185, %187 : vector<1x128xf32>
    %cst_56 = arith.constant 1.000000e+00 : f32
    %192 = vector.broadcast %cst_56 : f32 to vector<1x128xf32>
    %193 = arith.subf %192, %191 : vector<1x128xf32>
    %194 = arith.fptosi %186 : vector<1x128xf32> to vector<1x128xi32>
    %195 = arith.fptosi %187 : vector<1x128xf32> to vector<1x128xi32>
    %c0_i32_57 = arith.constant 0 : i32
    %c15_i32_58 = arith.constant 15 : i32
    %196 = vector.broadcast %c0_i32_57 : i32 to vector<1x128xi32>
    %197 = arith.maxsi %196, %194 : vector<1x128xi32>
    %198 = vector.broadcast %c15_i32_58 : i32 to vector<1x128xi32>
    %199 = arith.minsi %198, %197 : vector<1x128xi32>
    %c1_i32_59 = arith.constant 1 : i32
    %200 = vector.broadcast %c1_i32_59 : i32 to vector<1x128xi32>
    %201 = arith.addi %194, %200 : vector<1x128xi32>
    %c0_i32_60 = arith.constant 0 : i32
    %c15_i32_61 = arith.constant 15 : i32
    %202 = vector.broadcast %c0_i32_60 : i32 to vector<1x128xi32>
    %203 = arith.maxsi %202, %201 : vector<1x128xi32>
    %204 = vector.broadcast %c15_i32_61 : i32 to vector<1x128xi32>
    %205 = arith.minsi %204, %203 : vector<1x128xi32>
    %c0_i32_62 = arith.constant 0 : i32
    %c7_i32_63 = arith.constant 7 : i32
    %206 = vector.broadcast %c0_i32_62 : i32 to vector<1x128xi32>
    %207 = arith.maxsi %206, %195 : vector<1x128xi32>
    %208 = vector.broadcast %c7_i32_63 : i32 to vector<1x128xi32>
    %209 = arith.minsi %208, %207 : vector<1x128xi32>
    %c1_i32_64 = arith.constant 1 : i32
    %210 = vector.broadcast %c1_i32_64 : i32 to vector<1x128xi32>
    %211 = arith.addi %195, %210 : vector<1x128xi32>
    %c0_i32_65 = arith.constant 0 : i32
    %c7_i32_66 = arith.constant 7 : i32
    %212 = vector.broadcast %c0_i32_65 : i32 to vector<1x128xi32>
    %213 = arith.maxsi %212, %211 : vector<1x128xi32>
    %214 = vector.broadcast %c7_i32_66 : i32 to vector<1x128xi32>
    %215 = arith.minsi %214, %213 : vector<1x128xi32>
    %c16_i32_67 = arith.constant 16 : i32
    %216 = vector.broadcast %c16_i32_67 : i32 to vector<1x128xi32>
    %217 = arith.muli %209, %216 : vector<1x128xi32>
    %218 = arith.addi %217, %199 : vector<1x128xi32>
    %219 = arith.mulf %193, %190 : vector<1x128xf32>
    %c16_i32_68 = arith.constant 16 : i32
    %220 = vector.broadcast %c16_i32_68 : i32 to vector<1x128xi32>
    %221 = arith.muli %209, %220 : vector<1x128xi32>
    %222 = arith.addi %221, %205 : vector<1x128xi32>
    %223 = arith.mulf %193, %188 : vector<1x128xf32>
    %c16_i32_69 = arith.constant 16 : i32
    %224 = vector.broadcast %c16_i32_69 : i32 to vector<1x128xi32>
    %225 = arith.muli %215, %224 : vector<1x128xi32>
    %226 = arith.addi %225, %199 : vector<1x128xi32>
    %227 = arith.mulf %191, %190 : vector<1x128xf32>
    %c16_i32_70 = arith.constant 16 : i32
    %228 = vector.broadcast %c16_i32_70 : i32 to vector<1x128xi32>
    %229 = arith.muli %215, %228 : vector<1x128xi32>
    %230 = arith.addi %229, %205 : vector<1x128xi32>
    %231 = arith.mulf %191, %188 : vector<1x128xf32>
    %232 = vector.shape_cast %218 : vector<1x128xi32> to vector<1x128xi32>
    %233 = vector.broadcast %232 : vector<1x128xi32> to vector<16x128xi32>
    %c0_i32_71 = arith.constant 0 : i32
    %234 = vector.broadcast %c0_i32_71 : i32 to vector<16x128xi32>
    %235 = arith.cmpi slt, %233, %234 : vector<16x128xi32>
    %c128_i32_72 = arith.constant 128 : i32
    %236 = vector.broadcast %c128_i32_72 : i32 to vector<16x128xi32>
    %237 = arith.addi %233, %236 : vector<16x128xi32>
    %238 = arith.select %235, %237, %233 : vector<16x128xi1>, vector<16x128xi32>
    %239 = vector.shape_cast %238 : vector<16x128xi32> to vector<16x128x1xi32>
    %240 = vector.shape_cast %239 : vector<16x128x1xi32> to vector<16x128xi32>
    %241 = tpu.dynamic_gather %13[%240] in [1] : vector<16x128xf32>, vector<16x128xi32> -> vector<16x128xf32>
    %242 = vector.broadcast %219 : vector<1x128xf32> to vector<16x128xf32>
    %243 = arith.mulf %241, %242 : vector<16x128xf32>
    %244 = vector.shape_cast %222 : vector<1x128xi32> to vector<1x128xi32>
    %245 = vector.broadcast %244 : vector<1x128xi32> to vector<16x128xi32>
    %c0_i32_73 = arith.constant 0 : i32
    %246 = vector.broadcast %c0_i32_73 : i32 to vector<16x128xi32>
    %247 = arith.cmpi slt, %245, %246 : vector<16x128xi32>
    %c128_i32_74 = arith.constant 128 : i32
    %248 = vector.broadcast %c128_i32_74 : i32 to vector<16x128xi32>
    %249 = arith.addi %245, %248 : vector<16x128xi32>
    %250 = arith.select %247, %249, %245 : vector<16x128xi1>, vector<16x128xi32>
    %251 = vector.shape_cast %250 : vector<16x128xi32> to vector<16x128x1xi32>
    %252 = vector.shape_cast %251 : vector<16x128x1xi32> to vector<16x128xi32>
    %253 = tpu.dynamic_gather %13[%252] in [1] : vector<16x128xf32>, vector<16x128xi32> -> vector<16x128xf32>
    %254 = vector.broadcast %223 : vector<1x128xf32> to vector<16x128xf32>
    %255 = arith.mulf %253, %254 : vector<16x128xf32>
    %256 = arith.addf %243, %255 : vector<16x128xf32>
    %257 = vector.shape_cast %226 : vector<1x128xi32> to vector<1x128xi32>
    %258 = vector.broadcast %257 : vector<1x128xi32> to vector<16x128xi32>
    %c0_i32_75 = arith.constant 0 : i32
    %259 = vector.broadcast %c0_i32_75 : i32 to vector<16x128xi32>
    %260 = arith.cmpi slt, %258, %259 : vector<16x128xi32>
    %c128_i32_76 = arith.constant 128 : i32
    %261 = vector.broadcast %c128_i32_76 : i32 to vector<16x128xi32>
    %262 = arith.addi %258, %261 : vector<16x128xi32>
    %263 = arith.select %260, %262, %258 : vector<16x128xi1>, vector<16x128xi32>
    %264 = vector.shape_cast %263 : vector<16x128xi32> to vector<16x128x1xi32>
    %265 = vector.shape_cast %264 : vector<16x128x1xi32> to vector<16x128xi32>
    %266 = tpu.dynamic_gather %13[%265] in [1] : vector<16x128xf32>, vector<16x128xi32> -> vector<16x128xf32>
    %267 = vector.broadcast %227 : vector<1x128xf32> to vector<16x128xf32>
    %268 = arith.mulf %266, %267 : vector<16x128xf32>
    %269 = arith.addf %256, %268 : vector<16x128xf32>
    %270 = vector.shape_cast %230 : vector<1x128xi32> to vector<1x128xi32>
    %271 = vector.broadcast %270 : vector<1x128xi32> to vector<16x128xi32>
    %c0_i32_77 = arith.constant 0 : i32
    %272 = vector.broadcast %c0_i32_77 : i32 to vector<16x128xi32>
    %273 = arith.cmpi slt, %271, %272 : vector<16x128xi32>
    %c128_i32_78 = arith.constant 128 : i32
    %274 = vector.broadcast %c128_i32_78 : i32 to vector<16x128xi32>
    %275 = arith.addi %271, %274 : vector<16x128xi32>
    %276 = arith.select %273, %275, %271 : vector<16x128xi1>, vector<16x128xi32>
    %277 = vector.shape_cast %276 : vector<16x128xi32> to vector<16x128x1xi32>
    %278 = vector.shape_cast %277 : vector<16x128x1xi32> to vector<16x128xi32>
    %279 = tpu.dynamic_gather %13[%278] in [1] : vector<16x128xf32>, vector<16x128xi32> -> vector<16x128xf32>
    %280 = vector.broadcast %231 : vector<1x128xf32> to vector<16x128xf32>
    %281 = arith.mulf %279, %280 : vector<16x128xf32>
    %282 = arith.addf %269, %281 : vector<16x128xf32>
    %c0_79 = arith.constant 0 : index
    %c0_80 = arith.constant 0 : index
    %c128 = arith.constant 128 : index
    %283 = vector.load %arg9[%c0_79, %c0_80, %c128] : memref<1x16x512xf32, #tpu.memory_space<vmem>>, vector<1x16x128xf32>
    %284 = vector.shape_cast %283 : vector<1x16x128xf32> to vector<16x128xf32>
    %285 = vector.shape_cast %282 : vector<16x128xf32> to vector<1x16x128xf32>
    tpu.vector_store %arg9[%c0_79, %c0_80, %c128], %285 {strides = array<i32>} : memref<1x16x512xf32, #tpu.memory_space<vmem>>, vector<1x16x128xf32>,
    %c2 = arith.constant 2 : index
    %c0_81 = arith.constant 0 : index
    %286 = vector.load %arg5[%c2, %c0_81] : memref<4x128xi32, #tpu.memory_space<vmem>>, vector<1x128xi32>
    %c2_82 = arith.constant 2 : index
    %c0_83 = arith.constant 0 : index
    %287 = vector.load %arg6[%c2_82, %c0_83] : memref<4x128xi32, #tpu.memory_space<vmem>>, vector<1x128xi32>
    %288 = vector.shape_cast %286 : vector<1x128xi32> to vector<1x128xi32>
    %289 = vector.broadcast %288 : vector<1x128xi32> to vector<8x128xi32>
    %c0_i32_84 = arith.constant 0 : i32
    %290 = vector.broadcast %c0_i32_84 : i32 to vector<8x128xi32>
    %291 = arith.cmpi slt, %289, %290 : vector<8x128xi32>
    %c128_i32_85 = arith.constant 128 : i32
    %292 = vector.broadcast %c128_i32_85 : i32 to vector<8x128xi32>
    %293 = arith.addi %289, %292 : vector<8x128xi32>
    %294 = arith.select %291, %293, %289 : vector<8x128xi1>, vector<8x128xi32>
    %295 = vector.shape_cast %294 : vector<8x128xi32> to vector<8x128x1xi32>
    %296 = vector.shape_cast %295 : vector<8x128x1xi32> to vector<8x128xi32>
    %297 = tpu.dynamic_gather %8[%296] in [1] : vector<8x128xf32>, vector<8x128xi32> -> vector<8x128xf32>
    %298 = vector.extract_strided_slice %297 {offsets = [0, 0], sizes = [1, 128], strides = [1, 1]} : vector<8x128xf32> to vector<1x128xf32>
    %299 = vector.extract_strided_slice %297 {offsets = [4, 0], sizes = [1, 128], strides = [1, 1]} : vector<8x128xf32> to vector<1x128xf32>
    %c1_i32_86 = arith.constant 1 : i32
    %300 = vector.broadcast %c1_i32_86 : i32 to vector<1x128xi32>
    %301 = arith.cmpi eq, %287, %300 : vector<1x128xi32>
    %302 = vector.extract_strided_slice %297 {offsets = [1, 0], sizes = [1, 128], strides = [1, 1]} : vector<8x128xf32> to vector<1x128xf32>
    %303 = arith.select %301, %302, %298 : vector<1x128xi1>, vector<1x128xf32>
    %304 = vector.extract_strided_slice %297 {offsets = [5, 0], sizes = [1, 128], strides = [1, 1]} : vector<8x128xf32> to vector<1x128xf32>
    %305 = arith.select %301, %304, %299 : vector<1x128xi1>, vector<1x128xf32>
    %c2_i32_87 = arith.constant 2 : i32
    %306 = vector.broadcast %c2_i32_87 : i32 to vector<1x128xi32>
    %307 = arith.cmpi eq, %287, %306 : vector<1x128xi32>
    %308 = vector.extract_strided_slice %297 {offsets = [2, 0], sizes = [1, 128], strides = [1, 1]} : vector<8x128xf32> to vector<1x128xf32>
    %309 = arith.select %307, %308, %303 : vector<1x128xi1>, vector<1x128xf32>
    %310 = vector.extract_strided_slice %297 {offsets = [6, 0], sizes = [1, 128], strides = [1, 1]} : vector<8x128xf32> to vector<1x128xf32>
    %311 = arith.select %307, %310, %305 : vector<1x128xi1>, vector<1x128xf32>
    %c3_i32_88 = arith.constant 3 : i32
    %312 = vector.broadcast %c3_i32_88 : i32 to vector<1x128xi32>
    %313 = arith.cmpi eq, %287, %312 : vector<1x128xi32>
    %314 = vector.extract_strided_slice %297 {offsets = [3, 0], sizes = [1, 128], strides = [1, 1]} : vector<8x128xf32> to vector<1x128xf32>
    %315 = arith.select %313, %314, %309 : vector<1x128xi1>, vector<1x128xf32>
    %316 = vector.extract_strided_slice %297 {offsets = [7, 0], sizes = [1, 128], strides = [1, 1]} : vector<8x128xf32> to vector<1x128xf32>
    %317 = arith.select %313, %316, %311 : vector<1x128xi1>, vector<1x128xf32>
    %c2_89 = arith.constant 2 : index
    %c0_90 = arith.constant 0 : index
    %318 = vector.load %arg7[%c2_89, %c0_90] : memref<4x128xf32, #tpu.memory_space<vmem>>, vector<1x128xf32>
    %319 = arith.addf %318, %315 : vector<1x128xf32>
    %c2_91 = arith.constant 2 : index
    %c0_92 = arith.constant 0 : index
    %320 = vector.load %arg8[%c2_91, %c0_92] : memref<4x128xf32, #tpu.memory_space<vmem>>, vector<1x128xf32>
    %321 = arith.addf %320, %317 : vector<1x128xf32>
    %322 = math.floor %319 : vector<1x128xf32>
    %323 = math.floor %321 : vector<1x128xf32>
    %324 = arith.subf %319, %322 : vector<1x128xf32>
    %cst_93 = arith.constant 1.000000e+00 : f32
    %325 = vector.broadcast %cst_93 : f32 to vector<1x128xf32>
    %326 = arith.subf %325, %324 : vector<1x128xf32>
    %327 = arith.subf %321, %323 : vector<1x128xf32>
    %cst_94 = arith.constant 1.000000e+00 : f32
    %328 = vector.broadcast %cst_94 : f32 to vector<1x128xf32>
    %329 = arith.subf %328, %327 : vector<1x128xf32>
    %330 = arith.fptosi %322 : vector<1x128xf32> to vector<1x128xi32>
    %331 = arith.fptosi %323 : vector<1x128xf32> to vector<1x128xi32>
    %c0_i32_95 = arith.constant 0 : i32
    %c15_i32_96 = arith.constant 15 : i32
    %332 = vector.broadcast %c0_i32_95 : i32 to vector<1x128xi32>
    %333 = arith.maxsi %332, %330 : vector<1x128xi32>
    %334 = vector.broadcast %c15_i32_96 : i32 to vector<1x128xi32>
    %335 = arith.minsi %334, %333 : vector<1x128xi32>
    %c1_i32_97 = arith.constant 1 : i32
    %336 = vector.broadcast %c1_i32_97 : i32 to vector<1x128xi32>
    %337 = arith.addi %330, %336 : vector<1x128xi32>
    %c0_i32_98 = arith.constant 0 : i32
    %c15_i32_99 = arith.constant 15 : i32
    %338 = vector.broadcast %c0_i32_98 : i32 to vector<1x128xi32>
    %339 = arith.maxsi %338, %337 : vector<1x128xi32>
    %340 = vector.broadcast %c15_i32_99 : i32 to vector<1x128xi32>
    %341 = arith.minsi %340, %339 : vector<1x128xi32>
    %c0_i32_100 = arith.constant 0 : i32
    %c7_i32_101 = arith.constant 7 : i32
    %342 = vector.broadcast %c0_i32_100 : i32 to vector<1x128xi32>
    %343 = arith.maxsi %342, %331 : vector<1x128xi32>
    %344 = vector.broadcast %c7_i32_101 : i32 to vector<1x128xi32>
    %345 = arith.minsi %344, %343 : vector<1x128xi32>
    %c1_i32_102 = arith.constant 1 : i32
    %346 = vector.broadcast %c1_i32_102 : i32 to vector<1x128xi32>
    %347 = arith.addi %331, %346 : vector<1x128xi32>
    %c0_i32_103 = arith.constant 0 : i32
    %c7_i32_104 = arith.constant 7 : i32
    %348 = vector.broadcast %c0_i32_103 : i32 to vector<1x128xi32>
    %349 = arith.maxsi %348, %347 : vector<1x128xi32>
    %350 = vector.broadcast %c7_i32_104 : i32 to vector<1x128xi32>
    %351 = arith.minsi %350, %349 : vector<1x128xi32>
    %c16_i32_105 = arith.constant 16 : i32
    %352 = vector.broadcast %c16_i32_105 : i32 to vector<1x128xi32>
    %353 = arith.muli %345, %352 : vector<1x128xi32>
    %354 = arith.addi %353, %335 : vector<1x128xi32>
    %355 = arith.mulf %329, %326 : vector<1x128xf32>
    %c16_i32_106 = arith.constant 16 : i32
    %356 = vector.broadcast %c16_i32_106 : i32 to vector<1x128xi32>
    %357 = arith.muli %345, %356 : vector<1x128xi32>
    %358 = arith.addi %357, %341 : vector<1x128xi32>
    %359 = arith.mulf %329, %324 : vector<1x128xf32>
    %c16_i32_107 = arith.constant 16 : i32
    %360 = vector.broadcast %c16_i32_107 : i32 to vector<1x128xi32>
    %361 = arith.muli %351, %360 : vector<1x128xi32>
    %362 = arith.addi %361, %335 : vector<1x128xi32>
    %363 = arith.mulf %327, %326 : vector<1x128xf32>
    %c16_i32_108 = arith.constant 16 : i32
    %364 = vector.broadcast %c16_i32_108 : i32 to vector<1x128xi32>
    %365 = arith.muli %351, %364 : vector<1x128xi32>
    %366 = arith.addi %365, %341 : vector<1x128xi32>
    %367 = arith.mulf %327, %324 : vector<1x128xf32>
    %368 = vector.shape_cast %354 : vector<1x128xi32> to vector<1x128xi32>
    %369 = vector.broadcast %368 : vector<1x128xi32> to vector<16x128xi32>
    %c0_i32_109 = arith.constant 0 : i32
    %370 = vector.broadcast %c0_i32_109 : i32 to vector<16x128xi32>
    %371 = arith.cmpi slt, %369, %370 : vector<16x128xi32>
    %c128_i32_110 = arith.constant 128 : i32
    %372 = vector.broadcast %c128_i32_110 : i32 to vector<16x128xi32>
    %373 = arith.addi %369, %372 : vector<16x128xi32>
    %374 = arith.select %371, %373, %369 : vector<16x128xi1>, vector<16x128xi32>
    %375 = vector.shape_cast %374 : vector<16x128xi32> to vector<16x128x1xi32>
    %376 = vector.shape_cast %375 : vector<16x128x1xi32> to vector<16x128xi32>
    %377 = tpu.dynamic_gather %13[%376] in [1] : vector<16x128xf32>, vector<16x128xi32> -> vector<16x128xf32>
    %378 = vector.broadcast %355 : vector<1x128xf32> to vector<16x128xf32>
    %379 = arith.mulf %377, %378 : vector<16x128xf32>
    %380 = vector.shape_cast %358 : vector<1x128xi32> to vector<1x128xi32>
    %381 = vector.broadcast %380 : vector<1x128xi32> to vector<16x128xi32>
    %c0_i32_111 = arith.constant 0 : i32
    %382 = vector.broadcast %c0_i32_111 : i32 to vector<16x128xi32>
    %383 = arith.cmpi slt, %381, %382 : vector<16x128xi32>
    %c128_i32_112 = arith.constant 128 : i32
    %384 = vector.broadcast %c128_i32_112 : i32 to vector<16x128xi32>
    %385 = arith.addi %381, %384 : vector<16x128xi32>
    %386 = arith.select %383, %385, %381 : vector<16x128xi1>, vector<16x128xi32>
    %387 = vector.shape_cast %386 : vector<16x128xi32> to vector<16x128x1xi32>
    %388 = vector.shape_cast %387 : vector<16x128x1xi32> to vector<16x128xi32>
    %389 = tpu.dynamic_gather %13[%388] in [1] : vector<16x128xf32>, vector<16x128xi32> -> vector<16x128xf32>
    %390 = vector.broadcast %359 : vector<1x128xf32> to vector<16x128xf32>
    %391 = arith.mulf %389, %390 : vector<16x128xf32>
    %392 = arith.addf %379, %391 : vector<16x128xf32>
    %393 = vector.shape_cast %362 : vector<1x128xi32> to vector<1x128xi32>
    %394 = vector.broadcast %393 : vector<1x128xi32> to vector<16x128xi32>
    %c0_i32_113 = arith.constant 0 : i32
    %395 = vector.broadcast %c0_i32_113 : i32 to vector<16x128xi32>
    %396 = arith.cmpi slt, %394, %395 : vector<16x128xi32>
    %c128_i32_114 = arith.constant 128 : i32
    %397 = vector.broadcast %c128_i32_114 : i32 to vector<16x128xi32>
    %398 = arith.addi %394, %397 : vector<16x128xi32>
    %399 = arith.select %396, %398, %394 : vector<16x128xi1>, vector<16x128xi32>
    %400 = vector.shape_cast %399 : vector<16x128xi32> to vector<16x128x1xi32>
    %401 = vector.shape_cast %400 : vector<16x128x1xi32> to vector<16x128xi32>
    %402 = tpu.dynamic_gather %13[%401] in [1] : vector<16x128xf32>, vector<16x128xi32> -> vector<16x128xf32>
    %403 = vector.broadcast %363 : vector<1x128xf32> to vector<16x128xf32>
    %404 = arith.mulf %402, %403 : vector<16x128xf32>
    %405 = arith.addf %392, %404 : vector<16x128xf32>
    %406 = vector.shape_cast %366 : vector<1x128xi32> to vector<1x128xi32>
    %407 = vector.broadcast %406 : vector<1x128xi32> to vector<16x128xi32>
    %c0_i32_115 = arith.constant 0 : i32
    %408 = vector.broadcast %c0_i32_115 : i32 to vector<16x128xi32>
    %409 = arith.cmpi slt, %407, %408 : vector<16x128xi32>
    %c128_i32_116 = arith.constant 128 : i32
    %410 = vector.broadcast %c128_i32_116 : i32 to vector<16x128xi32>
    %411 = arith.addi %407, %410 : vector<16x128xi32>
    %412 = arith.select %409, %411, %407 : vector<16x128xi1>, vector<16x128xi32>
    %413 = vector.shape_cast %412 : vector<16x128xi32> to vector<16x128x1xi32>
    %414 = vector.shape_cast %413 : vector<16x128x1xi32> to vector<16x128xi32>
    %415 = tpu.dynamic_gather %13[%414] in [1] : vector<16x128xf32>, vector<16x128xi32> -> vector<16x128xf32>
    %416 = vector.broadcast %367 : vector<1x128xf32> to vector<16x128xf32>
    %417 = arith.mulf %415, %416 : vector<16x128xf32>
    %418 = arith.addf %405, %417 : vector<16x128xf32>
    %c0_117 = arith.constant 0 : index
    %c0_118 = arith.constant 0 : index
    %c256 = arith.constant 256 : index
    %419 = vector.load %arg9[%c0_117, %c0_118, %c256] : memref<1x16x512xf32, #tpu.memory_space<vmem>>, vector<1x16x128xf32>
    %420 = vector.shape_cast %419 : vector<1x16x128xf32> to vector<16x128xf32>
    %421 = vector.shape_cast %418 : vector<16x128xf32> to vector<1x16x128xf32>
    tpu.vector_store %arg9[%c0_117, %c0_118, %c256], %421 {strides = array<i32>} : memref<1x16x512xf32, #tpu.memory_space<vmem>>, vector<1x16x128xf32>,
    %c3 = arith.constant 3 : index
    %c0_119 = arith.constant 0 : index
    %422 = vector.load %arg5[%c3, %c0_119] : memref<4x128xi32, #tpu.memory_space<vmem>>, vector<1x128xi32>
    %c3_120 = arith.constant 3 : index
    %c0_121 = arith.constant 0 : index
    %423 = vector.load %arg6[%c3_120, %c0_121] : memref<4x128xi32, #tpu.memory_space<vmem>>, vector<1x128xi32>
    %424 = vector.shape_cast %422 : vector<1x128xi32> to vector<1x128xi32>
    %425 = vector.broadcast %424 : vector<1x128xi32> to vector<8x128xi32>
    %c0_i32_122 = arith.constant 0 : i32
    %426 = vector.broadcast %c0_i32_122 : i32 to vector<8x128xi32>
    %427 = arith.cmpi slt, %425, %426 : vector<8x128xi32>
    %c128_i32_123 = arith.constant 128 : i32
    %428 = vector.broadcast %c128_i32_123 : i32 to vector<8x128xi32>
    %429 = arith.addi %425, %428 : vector<8x128xi32>
    %430 = arith.select %427, %429, %425 : vector<8x128xi1>, vector<8x128xi32>
    %431 = vector.shape_cast %430 : vector<8x128xi32> to vector<8x128x1xi32>
    %432 = vector.shape_cast %431 : vector<8x128x1xi32> to vector<8x128xi32>
    %433 = tpu.dynamic_gather %8[%432] in [1] : vector<8x128xf32>, vector<8x128xi32> -> vector<8x128xf32>
    %434 = vector.extract_strided_slice %433 {offsets = [0, 0], sizes = [1, 128], strides = [1, 1]} : vector<8x128xf32> to vector<1x128xf32>
    %435 = vector.extract_strided_slice %433 {offsets = [4, 0], sizes = [1, 128], strides = [1, 1]} : vector<8x128xf32> to vector<1x128xf32>
    %c1_i32_124 = arith.constant 1 : i32
    %436 = vector.broadcast %c1_i32_124 : i32 to vector<1x128xi32>
    %437 = arith.cmpi eq, %423, %436 : vector<1x128xi32>
    %438 = vector.extract_strided_slice %433 {offsets = [1, 0], sizes = [1, 128], strides = [1, 1]} : vector<8x128xf32> to vector<1x128xf32>
    %439 = arith.select %437, %438, %434 : vector<1x128xi1>, vector<1x128xf32>
    %440 = vector.extract_strided_slice %433 {offsets = [5, 0], sizes = [1, 128], strides = [1, 1]} : vector<8x128xf32> to vector<1x128xf32>
    %441 = arith.select %437, %440, %435 : vector<1x128xi1>, vector<1x128xf32>
    %c2_i32_125 = arith.constant 2 : i32
    %442 = vector.broadcast %c2_i32_125 : i32 to vector<1x128xi32>
    %443 = arith.cmpi eq, %423, %442 : vector<1x128xi32>
    %444 = vector.extract_strided_slice %433 {offsets = [2, 0], sizes = [1, 128], strides = [1, 1]} : vector<8x128xf32> to vector<1x128xf32>
    %445 = arith.select %443, %444, %439 : vector<1x128xi1>, vector<1x128xf32>
    %446 = vector.extract_strided_slice %433 {offsets = [6, 0], sizes = [1, 128], strides = [1, 1]} : vector<8x128xf32> to vector<1x128xf32>
    %447 = arith.select %443, %446, %441 : vector<1x128xi1>, vector<1x128xf32>
    %c3_i32_126 = arith.constant 3 : i32
    %448 = vector.broadcast %c3_i32_126 : i32 to vector<1x128xi32>
    %449 = arith.cmpi eq, %423, %448 : vector<1x128xi32>
    %450 = vector.extract_strided_slice %433 {offsets = [3, 0], sizes = [1, 128], strides = [1, 1]} : vector<8x128xf32> to vector<1x128xf32>
    %451 = arith.select %449, %450, %445 : vector<1x128xi1>, vector<1x128xf32>
    %452 = vector.extract_strided_slice %433 {offsets = [7, 0], sizes = [1, 128], strides = [1, 1]} : vector<8x128xf32> to vector<1x128xf32>
    %453 = arith.select %449, %452, %447 : vector<1x128xi1>, vector<1x128xf32>
    %c3_127 = arith.constant 3 : index
    %c0_128 = arith.constant 0 : index
    %454 = vector.load %arg7[%c3_127, %c0_128] : memref<4x128xf32, #tpu.memory_space<vmem>>, vector<1x128xf32>
    %455 = arith.addf %454, %451 : vector<1x128xf32>
    %c3_129 = arith.constant 3 : index
    %c0_130 = arith.constant 0 : index
    %456 = vector.load %arg8[%c3_129, %c0_130] : memref<4x128xf32, #tpu.memory_space<vmem>>, vector<1x128xf32>
    %457 = arith.addf %456, %453 : vector<1x128xf32>
    %458 = math.floor %455 : vector<1x128xf32>
    %459 = math.floor %457 : vector<1x128xf32>
    %460 = arith.subf %455, %458 : vector<1x128xf32>
    %cst_131 = arith.constant 1.000000e+00 : f32
    %461 = vector.broadcast %cst_131 : f32 to vector<1x128xf32>
    %462 = arith.subf %461, %460 : vector<1x128xf32>
    %463 = arith.subf %457, %459 : vector<1x128xf32>
    %cst_132 = arith.constant 1.000000e+00 : f32
    %464 = vector.broadcast %cst_132 : f32 to vector<1x128xf32>
    %465 = arith.subf %464, %463 : vector<1x128xf32>
    %466 = arith.fptosi %458 : vector<1x128xf32> to vector<1x128xi32>
    %467 = arith.fptosi %459 : vector<1x128xf32> to vector<1x128xi32>
    %c0_i32_133 = arith.constant 0 : i32
    %c15_i32_134 = arith.constant 15 : i32
    %468 = vector.broadcast %c0_i32_133 : i32 to vector<1x128xi32>
    %469 = arith.maxsi %468, %466 : vector<1x128xi32>
    %470 = vector.broadcast %c15_i32_134 : i32 to vector<1x128xi32>
    %471 = arith.minsi %470, %469 : vector<1x128xi32>
    %c1_i32_135 = arith.constant 1 : i32
    %472 = vector.broadcast %c1_i32_135 : i32 to vector<1x128xi32>
    %473 = arith.addi %466, %472 : vector<1x128xi32>
    %c0_i32_136 = arith.constant 0 : i32
    %c15_i32_137 = arith.constant 15 : i32
    %474 = vector.broadcast %c0_i32_136 : i32 to vector<1x128xi32>
    %475 = arith.maxsi %474, %473 : vector<1x128xi32>
    %476 = vector.broadcast %c15_i32_137 : i32 to vector<1x128xi32>
    %477 = arith.minsi %476, %475 : vector<1x128xi32>
    %c0_i32_138 = arith.constant 0 : i32
    %c7_i32_139 = arith.constant 7 : i32
    %478 = vector.broadcast %c0_i32_138 : i32 to vector<1x128xi32>
    %479 = arith.maxsi %478, %467 : vector<1x128xi32>
    %480 = vector.broadcast %c7_i32_139 : i32 to vector<1x128xi32>
    %481 = arith.minsi %480, %479 : vector<1x128xi32>
    %c1_i32_140 = arith.constant 1 : i32
    %482 = vector.broadcast %c1_i32_140 : i32 to vector<1x128xi32>
    %483 = arith.addi %467, %482 : vector<1x128xi32>
    %c0_i32_141 = arith.constant 0 : i32
    %c7_i32_142 = arith.constant 7 : i32
    %484 = vector.broadcast %c0_i32_141 : i32 to vector<1x128xi32>
    %485 = arith.maxsi %484, %483 : vector<1x128xi32>
    %486 = vector.broadcast %c7_i32_142 : i32 to vector<1x128xi32>
    %487 = arith.minsi %486, %485 : vector<1x128xi32>
    %c16_i32_143 = arith.constant 16 : i32
    %488 = vector.broadcast %c16_i32_143 : i32 to vector<1x128xi32>
    %489 = arith.muli %481, %488 : vector<1x128xi32>
    %490 = arith.addi %489, %471 : vector<1x128xi32>
    %491 = arith.mulf %465, %462 : vector<1x128xf32>
    %c16_i32_144 = arith.constant 16 : i32
    %492 = vector.broadcast %c16_i32_144 : i32 to vector<1x128xi32>
    %493 = arith.muli %481, %492 : vector<1x128xi32>
    %494 = arith.addi %493, %477 : vector<1x128xi32>
    %495 = arith.mulf %465, %460 : vector<1x128xf32>
    %c16_i32_145 = arith.constant 16 : i32
    %496 = vector.broadcast %c16_i32_145 : i32 to vector<1x128xi32>
    %497 = arith.muli %487, %496 : vector<1x128xi32>
    %498 = arith.addi %497, %471 : vector<1x128xi32>
    %499 = arith.mulf %463, %462 : vector<1x128xf32>
    %c16_i32_146 = arith.constant 16 : i32
    %500 = vector.broadcast %c16_i32_146 : i32 to vector<1x128xi32>
    %501 = arith.muli %487, %500 : vector<1x128xi32>
    %502 = arith.addi %501, %477 : vector<1x128xi32>
    %503 = arith.mulf %463, %460 : vector<1x128xf32>
    %504 = vector.shape_cast %490 : vector<1x128xi32> to vector<1x128xi32>
    %505 = vector.broadcast %504 : vector<1x128xi32> to vector<16x128xi32>
    %c0_i32_147 = arith.constant 0 : i32
    %506 = vector.broadcast %c0_i32_147 : i32 to vector<16x128xi32>
    %507 = arith.cmpi slt, %505, %506 : vector<16x128xi32>
    %c128_i32_148 = arith.constant 128 : i32
    %508 = vector.broadcast %c128_i32_148 : i32 to vector<16x128xi32>
    %509 = arith.addi %505, %508 : vector<16x128xi32>
    %510 = arith.select %507, %509, %505 : vector<16x128xi1>, vector<16x128xi32>
    %511 = vector.shape_cast %510 : vector<16x128xi32> to vector<16x128x1xi32>
    %512 = vector.shape_cast %511 : vector<16x128x1xi32> to vector<16x128xi32>
    %513 = tpu.dynamic_gather %13[%512] in [1] : vector<16x128xf32>, vector<16x128xi32> -> vector<16x128xf32>
    %514 = vector.broadcast %491 : vector<1x128xf32> to vector<16x128xf32>
    %515 = arith.mulf %513, %514 : vector<16x128xf32>
    %516 = vector.shape_cast %494 : vector<1x128xi32> to vector<1x128xi32>
    %517 = vector.broadcast %516 : vector<1x128xi32> to vector<16x128xi32>
    %c0_i32_149 = arith.constant 0 : i32
    %518 = vector.broadcast %c0_i32_149 : i32 to vector<16x128xi32>
    %519 = arith.cmpi slt, %517, %518 : vector<16x128xi32>
    %c128_i32_150 = arith.constant 128 : i32
    %520 = vector.broadcast %c128_i32_150 : i32 to vector<16x128xi32>
    %521 = arith.addi %517, %520 : vector<16x128xi32>
    %522 = arith.select %519, %521, %517 : vector<16x128xi1>, vector<16x128xi32>
    %523 = vector.shape_cast %522 : vector<16x128xi32> to vector<16x128x1xi32>
    %524 = vector.shape_cast %523 : vector<16x128x1xi32> to vector<16x128xi32>
    %525 = tpu.dynamic_gather %13[%524] in [1] : vector<16x128xf32>, vector<16x128xi32> -> vector<16x128xf32>
    %526 = vector.broadcast %495 : vector<1x128xf32> to vector<16x128xf32>
    %527 = arith.mulf %525, %526 : vector<16x128xf32>
    %528 = arith.addf %515, %527 : vector<16x128xf32>
    %529 = vector.shape_cast %498 : vector<1x128xi32> to vector<1x128xi32>
    %530 = vector.broadcast %529 : vector<1x128xi32> to vector<16x128xi32>
    %c0_i32_151 = arith.constant 0 : i32
    %531 = vector.broadcast %c0_i32_151 : i32 to vector<16x128xi32>
    %532 = arith.cmpi slt, %530, %531 : vector<16x128xi32>
    %c128_i32_152 = arith.constant 128 : i32
    %533 = vector.broadcast %c128_i32_152 : i32 to vector<16x128xi32>
    %534 = arith.addi %530, %533 : vector<16x128xi32>
    %535 = arith.select %532, %534, %530 : vector<16x128xi1>, vector<16x128xi32>
    %536 = vector.shape_cast %535 : vector<16x128xi32> to vector<16x128x1xi32>
    %537 = vector.shape_cast %536 : vector<16x128x1xi32> to vector<16x128xi32>
    %538 = tpu.dynamic_gather %13[%537] in [1] : vector<16x128xf32>, vector<16x128xi32> -> vector<16x128xf32>
    %539 = vector.broadcast %499 : vector<1x128xf32> to vector<16x128xf32>
    %540 = arith.mulf %538, %539 : vector<16x128xf32>
    %541 = arith.addf %528, %540 : vector<16x128xf32>
    %542 = vector.shape_cast %502 : vector<1x128xi32> to vector<1x128xi32>
    %543 = vector.broadcast %542 : vector<1x128xi32> to vector<16x128xi32>
    %c0_i32_153 = arith.constant 0 : i32
    %544 = vector.broadcast %c0_i32_153 : i32 to vector<16x128xi32>
    %545 = arith.cmpi slt, %543, %544 : vector<16x128xi32>
    %c128_i32_154 = arith.constant 128 : i32
    %546 = vector.broadcast %c128_i32_154 : i32 to vector<16x128xi32>
    %547 = arith.addi %543, %546 : vector<16x128xi32>
    %548 = arith.select %545, %547, %543 : vector<16x128xi1>, vector<16x128xi32>
    %549 = vector.shape_cast %548 : vector<16x128xi32> to vector<16x128x1xi32>
    %550 = vector.shape_cast %549 : vector<16x128x1xi32> to vector<16x128xi32>
    %551 = tpu.dynamic_gather %13[%550] in [1] : vector<16x128xf32>, vector<16x128xi32> -> vector<16x128xf32>
    %552 = vector.broadcast %503 : vector<1x128xf32> to vector<16x128xf32>
    %553 = arith.mulf %551, %552 : vector<16x128xf32>
    %554 = arith.addf %541, %553 : vector<16x128xf32>
    %c0_155 = arith.constant 0 : index
    %c0_156 = arith.constant 0 : index
    %c384 = arith.constant 384 : index
    %555 = vector.load %arg9[%c0_155, %c0_156, %c384] : memref<1x16x512xf32, #tpu.memory_space<vmem>>, vector<1x16x128xf32>
    %556 = vector.shape_cast %555 : vector<1x16x128xf32> to vector<16x128xf32>
    %557 = vector.shape_cast %554 : vector<16x128xf32> to vector<1x16x128xf32>
    tpu.vector_store %arg9[%c0_155, %c0_156, %c384], %557 {strides = array<i32>} : memref<1x16x512xf32, #tpu.memory_space<vmem>>, vector<1x16x128xf32>,
    return
  }
  func.func @transform_0(%arg0: i32, %arg1: i32) -> (i32, i32, i32) {
    %c0_i32 = arith.constant 0 : i32
    %c0_i32_0 = arith.constant 0 : i32
    %c0_i32_1 = arith.constant 0 : i32
    return %arg0, %c0_i32, %c0_i32_0 : i32, i32, i32
  }
  func.func @transform_1(%arg0: i32, %arg1: i32) -> (i32, i32, i32) {
    %c0_i32 = arith.constant 0 : i32
    %c0_i32_0 = arith.constant 0 : i32
    %c0_i32_1 = arith.constant 0 : i32
    return %arg1, %c0_i32, %c0_i32_0 : i32, i32, i32
  }
  func.func @transform_2(%arg0: i32, %arg1: i32) -> (i32, i32, i32) {
    %c0_i32 = arith.constant 0 : i32
    %c0_i32_0 = arith.constant 0 : i32
    %c0_i32_1 = arith.constant 0 : i32
    return %arg1, %c0_i32, %c0_i32_0 : i32, i32, i32
  }
  func.func @transform_3(%arg0: i32, %arg1: i32) -> (i32, i32) {
    %c0_i32 = arith.constant 0 : i32
    %c0_i32_0 = arith.constant 0 : i32
    %c0_i32_1 = arith.constant 0 : i32
    return %c0_i32, %c0_i32_0 : i32, i32
  }
  func.func @transform_4(%arg0: i32, %arg1: i32) -> (i32, i32) {
    %c0_i32 = arith.constant 0 : i32
    %c0_i32_0 = arith.constant 0 : i32
    %c0_i32_1 = arith.constant 0 : i32
    return %c0_i32, %c0_i32_0 : i32, i32
  }
  func.func @transform_5(%arg0: i32, %arg1: i32) -> (i32, i32) {
    %c0_i32 = arith.constant 0 : i32
    %c0_i32_0 = arith.constant 0 : i32
    %c0_i32_1 = arith.constant 0 : i32
    return %c0_i32, %c0_i32_0 : i32, i32
  }
  func.func @transform_6(%arg0: i32, %arg1: i32) -> (i32, i32) {
    %c0_i32 = arith.constant 0 : i32
    %c0_i32_0 = arith.constant 0 : i32
    %c0_i32_1 = arith.constant 0 : i32
    return %c0_i32, %c0_i32_0 : i32, i32
  }
  func.func @transform_7(%arg0: i32, %arg1: i32) -> (i32, i32, i32) {
    %c0_i32 = arith.constant 0 : i32
    %c0_i32_0 = arith.constant 0 : i32
    return %arg0, %arg1, %c0_i32 : i32, i32, i32
  }
}

</mosaic_0001>

<llo_original>
// kernel: tpu_custom_call.1
$region0: #{tpu_custom_call.1}
  #allocation0 [shape = 'u32[]', space=smem, size = 0x4, offset = 0x4, fixed_abs, tag = 'smem constant byte address 0x4 - core index']
  #allocation1 [shape = 'u32[144,128]{1,0:T(1,128)}', space=vmem, size = 0x12000, scoped, tag = 'internal scratch']
  %s0 = inlined_call_operand.hbm [shape: f32[2,64,128], index: 0, kind: input, shape index: {}]
  %s1 = inlined_call_operand.vmem [shape: f32[4,8,64], index: 1, kind: input, shape index: {}]
  %s2 = inlined_call_operand.vmem [shape: f32[4,8,1], index: 2, kind: input, shape index: {}]
  %s3 = inlined_call_operand.vmem [shape: s32[4,128], index: 3, kind: input, shape index: {}]
  %s4 = inlined_call_operand.vmem [shape: s32[4,128], index: 4, kind: input, shape index: {}]
  %s5 = inlined_call_operand.vmem [shape: f32[4,128], index: 5, kind: input, shape index: {}]
  %s6 = inlined_call_operand.vmem [shape: f32[4,128], index: 6, kind: input, shape index: {}]
  %s7 = inlined_call_operand.hbm [shape: f32[2,64,512], index: 7, kind: output, shape index: {}]
  %s8 = sld [smem:[#allocation0]]
  $region65: #{tpu_custom_call.1} parent=0
    _
  %s10 = ssub.s32 1, %s8
  %s11 = scalar_select 0, %s10, %s8
  $region1: #{tpu_custom_call.1} parent=0
    #allocation2 [shape = 'u8[65536]{0}', space=vmem, size = 0x10000, scoped, tag = 'input window, operand 0']
    #allocation3 [shape = 's32[2]{0}', space=sflag, size = 0x8, scoped, tag = 'scoped memory for tpu_custom_call.1']
    #allocation4 [shape = 's32[2]{0}', space=sflag, size = 0x8, scoped, tag = 'scoped memory for tpu_custom_call.1']
    #allocation5 [shape = 'u8[65536]{0}', space=vmem, size = 0x10000, scoped, tag = 'output window, operand 0']
    %12 = vsyncpa [#allocation3], 0
    %s13 = scalar_lea.sflag [#allocation3], 1
    %14 = vsyncpa %s13, 0
    %15 = vsyncpa [#allocation4], 0
    %s16 = scalar_lea.sflag [#allocation4], 1
    %17 = vsyncpa %s16, 0
    loop: start=0, step=1, limit=10
    $region2: #{tpu_custom_call.1} parent=1 // loop_pre_header
      _
    $region3: #{tpu_custom_call.1} parent=1 // loop_header
      %s19 = sphi 0, %s23
      %p20 = scmp.ge.s32.totalorder %s19, 10
      %s26 = sphi 0, %s38
      %s27 = sphi 0, %s34
      %s28 = sphi 0, %s26
      %s29 = sphi 0, %s27
      %s30 = sphi 0, %s28
      %s31 = sphi 0, %s29
      %s41 = sphi 0, %s43
      %s44 = sphi 0, %s41
      %s45 = sphi 0, %s44
      %s61 = sphi 0, %s45
      %s67 = sphi 0, %s69
      %s70 = sphi 0, %s67
      %s71 = sphi 0, %s70
      %s87 = sphi 0, %s71
      %s93 = sphi 0, %s95
      %s96 = sphi 0, %s93
      %s97 = sphi 0, %s96
      %s113 = sphi 0, %s97
      %s117 = sphi 0, %s117
      %s119 = sphi 0, %s117
      %s120 = sphi 0, %s119
      %s134 = sphi 0, %s120
      %s138 = sphi 0, %s138
      %s140 = sphi 0, %s138
      %s141 = sphi 0, %s140
      %s155 = sphi 0, %s141
      %s159 = sphi 0, %s159
      %s161 = sphi 0, %s159
      %s162 = sphi 0, %s161
      %s176 = sphi 0, %s162
      %s180 = sphi 0, %s180
      %s182 = sphi 0, %s180
      %s183 = sphi 0, %s182
      %s197 = sphi 0, %s183
      %s205 = sphi 0, %s207
      %s208 = sphi 0, %s205
      %s209 = sphi 0, %s208
      %s225 = sphi 0, %s209
    $region4: #{tpu_custom_call.1} parent=1 // loop_header_branch
      %22 = sbr.rel (%p20) target = $region8
    $region5: #{tpu_custom_call.1} parent=1 // loop_body
      %s24 = ssub.s32 %s19, 1
      %s25 = ssub.s32 %s19, 2
      %s32 = sadd.s32 1, %s27
      %p33 = scmp.ge.s32.totalorder %s32, 4
      %s34 = scalar_select %p33, 0, %s32
      %s35 = sadd.s32 1, %s26
      %s36 = scalar_select %p33, %s35, %s26
      %p37 = scmp.ge.s32.totalorder %s36, 2
      %s38 = scalar_select %p37, 0, %s36
      %s39 = ssub.s32 %s26, %s38
      %p40 = scmp.eq.s32.totalorder %s39, 0
      %s42 = sadd.s32 %s41, 1
      %s43 = scalar_select %p40, %s41, %s42
      %p46 = pneg %p40
      %p47 = scmp.eq.s32.totalorder %s19, 7
      %p48 = por %p46, %p47
      %p49 = scmp.ne.s32.totalorder %s41, %s44
      %p50 = scmp.eq.s32.totalorder %s19, 0
      %p51 = por %p49, %p50
      %p52 = scmp.ne.s32.totalorder %s41, %s44
      %p53 = scmp.eq.s32.totalorder %s24, 7
      %p54 = por %p52, %p53
      %p55 = scmp.ne.s32.totalorder %s44, %s45
      %p56 = scmp.eq.s32.totalorder %s24, 0
      %p57 = por %p55, %p56
      %p58 = scmp.ne.s32.totalorder %s44, %s45
      %p59 = scmp.eq.s32.totalorder %s25, 7
      %p60 = por %p58, %p59
      %p62 = scmp.ne.s32.totalorder %s45, %s61
      %p63 = scmp.eq.s32.totalorder %s25, 0
      %p64 = por %p62, %p63
      %s65 = ssub.s32 %s27, %s34
      %p66 = scmp.eq.s32.totalorder %s65, 0
      %s68 = sadd.s32 %s67, 1
      %s69 = scalar_select %p66, %s67, %s68
      %p72 = pneg %p66
      %p73 = scmp.eq.s32.totalorder %s19, 7
      %p74 = por %p72, %p73
      %p75 = scmp.ne.s32.totalorder %s67, %s70
      %p76 = scmp.eq.s32.totalorder %s19, 0
      %p77 = por %p75, %p76
      %p78 = scmp.ne.s32.totalorder %s67, %s70
      %p79 = scmp.eq.s32.totalorder %s24, 7
      %p80 = por %p78, %p79
      %p81 = scmp.ne.s32.totalorder %s70, %s71
      %p82 = scmp.eq.s32.totalorder %s24, 0
      %p83 = por %p81, %p82
      %p84 = scmp.ne.s32.totalorder %s70, %s71
      %p85 = scmp.eq.s32.totalorder %s25, 7
      %p86 = por %p84, %p85
      %p88 = scmp.ne.s32.totalorder %s71, %s87
      %p89 = scmp.eq.s32.totalorder %s25, 0
      %p90 = por %p88, %p89
      %s91 = ssub.s32 %s27, %s34
      %p92 = scmp.eq.s32.totalorder %s91, 0
      %s94 = sadd.s32 %s93, 1
      %s95 = scalar_select %p92, %s93, %s94
      %p98 = pneg %p92
      %p99 = scmp.eq.s32.totalorder %s19, 7
      %p100 = por %p98, %p99
      %p101 = scmp.ne.s32.totalorder %s93, %s96
      %p102 = scmp.eq.s32.totalorder %s19, 0
      %p103 = por %p101, %p102
      %p104 = scmp.ne.s32.totalorder %s93, %s96
      %p105 = scmp.eq.s32.totalorder %s24, 7
      %p106 = por %p104, %p105
      %p107 = scmp.ne.s32.totalorder %s96, %s97
      %p108 = scmp.eq.s32.totalorder %s24, 0
      %p109 = por %p107, %p108
      %p110 = scmp.ne.s32.totalorder %s96, %s97
      %p111 = scmp.eq.s32.totalorder %s25, 7
      %p112 = por %p110, %p111
      %p114 = scmp.ne.s32.totalorder %s97, %s113
      %p115 = scmp.eq.s32.totalorder %s25, 0
      %p116 = por %p114, %p115
      %s118 = sadd.s32 %s117, 1
      %p121 = scmp.eq.s32.totalorder %s19, 7
      %p122 = scmp.ne.s32.totalorder %s117, %s119
      %p123 = scmp.eq.s32.totalorder %s19, 0
      %p124 = por %p122, %p123
      %p125 = scmp.ne.s32.totalorder %s117, %s119
      %p126 = scmp.eq.s32.totalorder %s24, 7
      %p127 = por %p125, %p126
      %p128 = scmp.ne.s32.totalorder %s119, %s120
      %p129 = scmp.eq.s32.totalorder %s24, 0
      %p130 = por %p128, %p129
      %p131 = scmp.ne.s32.totalorder %s119, %s120
      %p132 = scmp.eq.s32.totalorder %s25, 7
      %p133 = por %p131, %p132
      %p135 = scmp.ne.s32.totalorder %s120, %s134
      %p136 = scmp.eq.s32.totalorder %s25, 0
      %p137 = por %p135, %p136
      %s139 = sadd.s32 %s138, 1
      %p142 = scmp.eq.s32.totalorder %s19, 7
      %p143 = scmp.ne.s32.totalorder %s138, %s140
      %p144 = scmp.eq.s32.totalorder %s19, 0
      %p145 = por %p143, %p144
      %p146 = scmp.ne.s32.totalorder %s138, %s140
      %p147 = scmp.eq.s32.totalorder %s24, 7
      %p148 = por %p146, %p147
      %p149 = scmp.ne.s32.totalorder %s140, %s141
      %p150 = scmp.eq.s32.totalorder %s24, 0
      %p151 = por %p149, %p150
      %p152 = scmp.ne.s32.totalorder %s140, %s141
      %p153 = scmp.eq.s32.totalorder %s25, 7
      %p154 = por %p152, %p153
      %p156 = scmp.ne.s32.totalorder %s141, %s155
      %p157 = scmp.eq.s32.totalorder %s25, 0
      %p158 = por %p156, %p157
      %s160 = sadd.s32 %s159, 1
      %p163 = scmp.eq.s32.totalorder %s19, 7
      %p164 = scmp.ne.s32.totalorder %s159, %s161
      %p165 = scmp.eq.s32.totalorder %s19, 0
      %p166 = por %p164, %p165
      %p167 = scmp.ne.s32.totalorder %s159, %s161
      %p168 = scmp.eq.s32.totalorder %s24, 7
      %p169 = por %p167, %p168
      %p170 = scmp.ne.s32.totalorder %s161, %s162
      %p171 = scmp.eq.s32.totalorder %s24, 0
      %p172 = por %p170, %p171
      %p173 = scmp.ne.s32.totalorder %s161, %s162
      %p174 = scmp.eq.s32.totalorder %s25, 7
      %p175 = por %p173, %p174
      %p177 = scmp.ne.s32.totalorder %s162, %s176
      %p178 = scmp.eq.s32.totalorder %s25, 0
      %p179 = por %p177, %p178
      %s181 = sadd.s32 %s180, 1
      %p184 = scmp.eq.s32.totalorder %s19, 7
      %p185 = scmp.ne.s32.totalorder %s180, %s182
      %p186 = scmp.eq.s32.totalorder %s19, 0
      %p187 = por %p185, %p186
      %p188 = scmp.ne.s32.totalorder %s180, %s182
      %p189 = scmp.eq.s32.totalorder %s24, 7
      %p190 = por %p188, %p189
      %p191 = scmp.ne.s32.totalorder %s182, %s183
      %p192 = scmp.eq.s32.totalorder %s24, 0
      %p193 = por %p191, %p192
      %p194 = scmp.ne.s32.totalorder %s182, %s183
      %p195 = scmp.eq.s32.totalorder %s25, 7
      %p196 = por %p194, %p195
      %p198 = scmp.ne.s32.totalorder %s183, %s197
      %p199 = scmp.eq.s32.totalorder %s25, 0
      %p200 = por %p198, %p199
      %s201 = ssub.s32 %s26, %s38
      %s202 = ssub.s32 %s27, %s34
      %s203 = sor.u32 %s201, %s202
      %p204 = scmp.eq.s32.totalorder %s203, 0
      %s206 = sadd.s32 %s205, 1
      %s207 = scalar_select %p204, %s205, %s206
      %p210 = pneg %p204
      %p211 = scmp.eq.s32.totalorder %s19, 7
      %p212 = por %p210, %p211
      %p213 = scmp.ne.s32.totalorder %s205, %s208
      %p214 = scmp.eq.s32.totalorder %s19, 0
      %p215 = por %p213, %p214
      %p216 = scmp.ne.s32.totalorder %s205, %s208
      %p217 = scmp.eq.s32.totalorder %s24, 7
      %p218 = por %p216, %p217
      %p219 = scmp.ne.s32.totalorder %s208, %s209
      %p220 = scmp.eq.s32.totalorder %s24, 0
      %p221 = por %p219, %p220
      %p222 = scmp.ne.s32.totalorder %s208, %s209
      %p223 = scmp.eq.s32.totalorder %s25, 7
      %p224 = por %p222, %p223
      %p226 = scmp.ne.s32.totalorder %s209, %s225
      %p227 = scmp.eq.s32.totalorder %s25, 0
      %p228 = por %p226, %p227
      %p229 = scmp.le.s32.totalorder 1, %s19
      %p230 = scmp.lt.s32.totalorder %s19, 9
      %p231 = pnand %p229, %p230
      %p232 = pneg %p231
      // Predicated region
      $region9: #{tpu_custom_call.1} parent=5 // pred_check
        _
      $region10: #{tpu_custom_call.1} parent=5 // pred_check_branch
        %234 = sbr.rel (%p231) target = $region12
      $region11: #{tpu_custom_call.1} parent=5 // pred_region
        %s235 = ssub.s32 %s19, 1
        // Predicated region
        $region13: #{tpu_custom_call.1} parent=11 // pred_check
          %p236 = pneg %p130
        $region14: #{tpu_custom_call.1} parent=11 // pred_check_branch
          %238 = sbr.rel (%p236) target = $region16
        $region15: #{tpu_custom_call.1} parent=11 // pred_region
          _
        $region16: #{tpu_custom_call.1} parent=11 // pred_fallthru
          _
        // Predicated region
        $region17: #{tpu_custom_call.1} parent=11 // pred_check
          %p239 = pneg %p151
        $region18: #{tpu_custom_call.1} parent=11 // pred_check_branch
          %241 = sbr.rel (%p239) target = $region20
        $region19: #{tpu_custom_call.1} parent=11 // pred_region
          _
        $region20: #{tpu_custom_call.1} parent=11 // pred_fallthru
          _
        // Predicated region
        $region21: #{tpu_custom_call.1} parent=11 // pred_check
          %p242 = pneg %p172
        $region22: #{tpu_custom_call.1} parent=11 // pred_check_branch
          %244 = sbr.rel (%p242) target = $region24
        $region23: #{tpu_custom_call.1} parent=11 // pred_region
          _
        $region24: #{tpu_custom_call.1} parent=11 // pred_fallthru
          _
        // Predicated region
        $region25: #{tpu_custom_call.1} parent=11 // pred_check
          %p245 = pneg %p193
        $region26: #{tpu_custom_call.1} parent=11 // pred_check_branch
          %247 = sbr.rel (%p245) target = $region28
        $region27: #{tpu_custom_call.1} parent=11 // pred_region
          _
        $region28: #{tpu_custom_call.1} parent=11 // pred_fallthru
          _
      $region12: #{tpu_custom_call.1} parent=5 // pred_fallthru
        _
      %p248 = scmp.lt.s32.totalorder %s19, 8
      // Predicated region
      $region29: #{tpu_custom_call.1} parent=5 // pred_check
        %p249 = pneg %p248
      $region30: #{tpu_custom_call.1} parent=5 // pred_check_branch
        %251 = sbr.rel (%p249) target = $region32
      $region31: #{tpu_custom_call.1} parent=5 // pred_region
        // Predicated region
        $region33: #{tpu_custom_call.1} parent=31 // pred_check
          %p252 = pneg %p51
        $region34: #{tpu_custom_call.1} parent=31 // pred_check_branch
          %254 = sbr.rel (%p252) target = $region36
        $region35: #{tpu_custom_call.1} parent=31 // pred_region
          %s255 = sand.u32 %s41, 1
          %s256 = scalar_lea.sflag [#allocation3], %s255
          %s257 = sand.u32 %s41, 1
          %s258 = smul.addr %s257, 64
          %s259 = scalar_lea.vmem [#allocation2], %s258
          %s261 = ssub.s32 1024, 1024
          %262 = vsyncadd %s256, %s261
          %s263 = smul.addr %s26, 8
          %s264 = smul.addr %s263, 128
          %s265 = scalar_lea.hbm %s0, %s264
          %s266 = sshll.u32 %s259, 4
          %s267 = int_to_ptr.vmem [resolvable:$true] %s266
          %272 = dma.hbm_to_vmem [thread:$0]  %s265, 1024, %s267, %s256, 128, 128, 8
        $region36: #{tpu_custom_call.1} parent=31 // pred_fallthru
          _
        // Predicated region
        $region37: #{tpu_custom_call.1} parent=31 // pred_check
          %p273 = pneg %p77
        $region38: #{tpu_custom_call.1} parent=31 // pred_check_branch
          %275 = sbr.rel (%p273) target = $region40
        $region39: #{tpu_custom_call.1} parent=31 // pred_region
          %p276 = scmp.lt.s32.totalorder %s27, 3
          %s277 = scalar_select %p276, %s27, 3
          %s278 = smul.addr %s277, 8
          %s279 = scalar_lea.vmem %s1, %s278
        $region40: #{tpu_custom_call.1} parent=31 // pred_fallthru
          _
        // Predicated region
        $region41: #{tpu_custom_call.1} parent=31 // pred_check
          %p280 = pneg %p103
        $region42: #{tpu_custom_call.1} parent=31 // pred_check_branch
          %282 = sbr.rel (%p280) target = $region44
        $region43: #{tpu_custom_call.1} parent=31 // pred_region
          %p283 = scmp.lt.s32.totalorder %s27, 3
          %s284 = scalar_select %p283, %s27, 3
          %s285 = smul.addr %s284, 8
          %s286 = scalar_lea.vmem %s2, %s285
        $region44: #{tpu_custom_call.1} parent=31 // pred_fallthru
          _
      $region32: #{tpu_custom_call.1} parent=5 // pred_fallthru
        _
      %p287 = scmp.le.s32.totalorder 1, %s19
      %p288 = scmp.lt.s32.totalorder %s19, 9
      %p289 = pnand %p287, %p288
      %p290 = pneg %p289
      // Predicated region
      $region45: #{tpu_custom_call.1} parent=5 // pred_check
        _
      $region46: #{tpu_custom_call.1} parent=5 // pred_check_branch
        %292 = sbr.rel (%p289) target = $region48
      $region47: #{tpu_custom_call.1} parent=5 // pred_region
        %s293 = ssub.s32 %s19, 1
        %s294 = sand.u32 %s44, 1
        %s295 = scalar_lea.sflag [#allocation3], %s294
        %s296 = sand.u32 %s44, 1
        %s297 = smul.addr %s296, 64
        %s298 = scalar_lea.vmem [#allocation2], %s297
        // Predicated region
        $region49: #{tpu_custom_call.1} parent=47 // pred_check
          %p299 = pneg %p57
        $region50: #{tpu_custom_call.1} parent=47 // pred_check_branch
          %301 = sbr.rel (%p299) target = $region52
        $region51: #{tpu_custom_call.1} parent=47 // pred_region
          %302 = dma.done %s295, 1024
        $region52: #{tpu_custom_call.1} parent=47 // pred_fallthru
          _
        %s303 = sand.u32 %s44, 1
        %s304 = scalar_lea.sflag [#allocation3], %s303
        %s305 = sand.u32 %s44, 1
        %s306 = smul.addr %s305, 64
        %s307 = scalar_lea.vmem [#allocation2], %s306
        %p308 = pneg %p57
        %p309 = pneg %p54
        %p310 = scmp.lt.s32.totalorder %s29, 3
        %s311 = scalar_select %p310, %s29, 3
        %s312 = smul.addr %s311, 8
        %s313 = scalar_lea.vmem %s1, %s312
        %p314 = pneg %p83
        %p315 = pneg %p80
        %p316 = scmp.lt.s32.totalorder %s29, 3
        %s317 = scalar_select %p316, %s29, 3
        %s318 = smul.addr %s317, 8
        %s319 = scalar_lea.vmem %s2, %s318
        %p320 = pneg %p109
        %p321 = pneg %p106
        %p322 = pneg %p130
        %p323 = pneg %p127
        %p324 = pneg %p151
        %p325 = pneg %p148
        %p326 = pneg %p172
        %p327 = pneg %p169
        %p328 = pneg %p193
        %p329 = pneg %p190
        %p330 = pneg %p221
        %p331 = pneg %p218
        %s332 = sand.u32 %s208, 1
        %s333 = scalar_lea.sflag [#allocation4], %s332
        %s334 = sand.u32 %s208, 1
        %s335 = smul.addr %s334, 64
        %s336 = scalar_lea.vmem [#allocation5], %s335
        %p337 = scmp.lt.s32.totalorder %s29, 3
        %s338 = scalar_select %p337, %s29, 3
        %s339 = smul.addr %s338, 8
        %s340 = scalar_lea.vmem %s1, %s339
        %p341 = scmp.lt.s32.totalorder %s29, 3
        %s342 = scalar_select %p341, %s29, 3
        %s343 = smul.addr %s342, 8
        %s344 = scalar_lea.vmem %s2, %s343
        %s345 = smul.u32 2, %s29
        %v346 = vld [vmem:[%s340] sm:$0xff]
        %v347 = vld [vmem:[%s298] sm:$0xff]
        %v348 = vld [vmem:[%s298 + $0x8] sm:$0xff]
        %v349 = vld [vmem:[%s298 + $0x10] sm:$0xff]
        %v350 = vld [vmem:[%s298 + $0x18] sm:$0xff]
        %v351 = vld [vmem:[%s298 + $0x20] sm:$0xff]
        %v352 = vld [vmem:[%s298 + $0x28] sm:$0xff]
        %v353 = vld [vmem:[%s298 + $0x30] sm:$0xff]
        %v354 = vld [vmem:[%s298 + $0x38] sm:$0xff]
        %v355 = vld [vmem:[%s344] sm:$0xff]
        %357 = vset.pattern.permute.xlu0 0
        %358 = vperm.xlu0 %357, %v355
        %v359 = vpop.permute.xlu0 %358
        %vm361 = vcmask 523264
        %v363 = vsel %vm361, %v346, 0
        %365 = vmatprep.subr.mxu0 0.0
        %366 = vmatpush1.msra.mxu0 %v347
        %367 = vmatprep.subr.mxu0 0.0
        %368 = vmatpush1.msra.mxu0 %v348
        %369 = vmatprep.subr.mxu0 0.0
        %370 = vmatpush1.msra.mxu0 %v349
        %371 = vmatprep.subr.mxu0 0.0
        %372 = vmatpush1.msra.mxu0 %v350
        %373 = vmatprep.subr.mxu0 0.0
        %374 = vmatpush1.msra.mxu0 %v351
        %375 = vmatprep.subr.mxu0 0.0
        %376 = vmatpush1.msra.mxu0 %v352
        %377 = vmatprep.subr.mxu0 0.0
        %378 = vmatpush1.msra.mxu0 %v353
        %379 = vmatprep.subr.mxu0 0.0
        %380 = vmatpush1.msra.mxu0 %v354
        %381 = vmatprep.subr.mxu0 0.0
        %382 = vmatpush1.msra.mxu0 0.0
        %383 = vmatprep.subr.mxu0 0.0
        %384 = vmatpush1.msra.mxu0 0.0
        %385 = vmatprep.subr.mxu0 0.0
        %386 = vmatpush1.msra.mxu0 0.0
        %387 = vmatprep.subr.mxu0 0.0
        %388 = vmatpush1.msra.mxu0 0.0
        %389 = vmatprep.subr.mxu0 0.0
        %390 = vmatpush1.msra.mxu0 0.0
        %391 = vmatprep.subr.mxu0 0.0
        %392 = vmatpush1.msra.mxu0 0.0
        %393 = vmatprep.subr.mxu0 0.0
        %394 = vmatpush1.msra.mxu0 0.0
        %395 = vmatprep.subr.mxu0 0.0
        %396 = vmatpush1.msra.mxu0 0.0
        %397 = vmatprep.subr.mxu0 0.0
        %398 = vmatpush1.msra.mxu0 0.0
        %399 = vmatprep.subr.mxu0 0.0
        %400 = vmatpush1.msra.mxu0 0.0
        %401 = vmatprep.subr.mxu0 0.0
        %402 = vmatpush1.msra.mxu0 0.0
        %403 = vmatprep.subr.mxu0 0.0
        %404 = vmatpush1.msra.mxu0 0.0
        %405 = vmatprep.subr.mxu0 0.0
        %406 = vmatpush1.msra.mxu0 0.0
        %407 = vmatprep.subr.mxu0 0.0
        %408 = vmatpush1.msra.mxu0 0.0
        %409 = vmatprep.subr.mxu0 0.0
        %410 = vmatpush1.msra.mxu0 0.0
        %411 = vmatprep.subr.mxu0 0.0
        %412 = vmatpush1.msra.mxu0 0.0
        %413 = vmatprep.subr.mxu0 0.0
        %414 = vmatpush1.msra.mxu0 0.0
        %415 = vmatprep.subr.mxu0 0.0
        %416 = vmatpush1.msra.mxu0 0.0
        %417 = vmatprep.subr.mxu0 0.0
        %418 = vmatpush1.msra.mxu0 0.0
        %419 = vmatprep.subr.mxu0 0.0
        %420 = vmatpush1.msra.mxu0 0.0
        %421 = vmatprep.subr.mxu0 0.0
        %422 = vmatpush1.msra.mxu0 0.0
        %423 = vmatprep.subr.mxu0 0.0
        %424 = vmatpush1.msra.mxu0 0.0
        %425 = vmatprep.subr.mxu0 0.0
        %426 = vmatpush1.msra.mxu0 0.0
        %427 = vmatprep.subr.mxu0 0.0
        %428 = vmatpush1.msra.mxu0 0.0
        %429 = vmatprep.mubr.f32.mxu0 0.0
        %430 = vmatmul.mubr.f32.gmra.mrb[0].mxu0 %v363
        %v431 = vpop.f32.mrb[0].mxu0
        %v432 = vadd.f32 %v359, %v431
        %v433 = vpop.f32.mrb[0].mxu0
        %434 = vdwg.mxu0
        %s435 = smul.u32 %s29, 16
        %s436 = scalar_lea.vmem %s298, %s435 [#allocation2]
        %v437 = vld [vmem:[%s436] sm:$0xff]
        %v438 = vld [vmem:[%s436 + $0x8] sm:$0xff]
        %v439 = vld [vmem:[%s3] sm:$0x1]
        %v440 = vld [vmem:[%s4] sm:$0x1]
        %v441 = vlaneseq
        %v442 = vshrl.u32 %v441, 7
        %v443 = vsub.s32 0, %v442
        %v444 = vrot.slane %v439, %v443
        %vm445 = vcmp.lt.s32.totalorder %v444, 0
        %v446 = vadd.s32 %v444, 128
        %v447 = vsel %vm445, %v446, %v444
        %448 = vset.pattern.permute.xlu0 %v447
        %449 = vperm.xlu0 %448, %v432
        %v450 = vpop.permute.xlu0 %449
        %vm451 = vcmp.eq.s32.totalorder %v440, 1
        %v453 = vrot.slane %v450, 1
        %v455 = vsel %vm451, %v453, %v450
        %v456 = vrot.slane %v450, 5
        %v458 = vrot.slane %v450, 4
        %v460 = vsel %vm451, %v456, %v458
        %vm461 = vcmp.eq.s32.totalorder %v440, 2
        %v462 = vrot.slane %v450, 2
        %v464 = vsel %vm461, %v462, %v455
        %v465 = vrot.slane %v450, 6
        %v467 = vsel %vm461, %v465, %v460
        %vm468 = vcmp.eq.s32.totalorder %v440, 3
        %v469 = vrot.slane %v450, 3
        %v471 = vsel %vm468, %v469, %v464
        %v472 = vrot.slane %v450, 7
        %v474 = vsel %vm468, %v472, %v467
        %v475 = vld [vmem:[%s5] sm:$0x1]
        %v476 = vadd.f32 %v475, %v471
        %v477 = vld [vmem:[%s6] sm:$0x1]
        %v478 = vadd.f32 %v477, %v474
        %v479 = vfloor.f32 %v476
        %v480 = vfloor.f32 %v478
        %v481 = vsub.f32 %v476, %v479
        %v482 = vsub.f32 1.0, %v481
        %v483 = vsub.f32 %v478, %v480
        %v484 = vsub.f32 1.0, %v483
        %v485 = vcvt.f32.s32.to.zero.pseudo %v479
        %v486 = vcvt.f32.s32.to.zero.pseudo %v480
        %vm487 = vcmp.gt.s32.totalorder %v485, 0
        %v488 = vsel %vm487, %v485, 0
        %vm489 = vcmp.lt.s32.totalorder %v488, 15
        %v490 = vsel %vm489, %v488, 15
        %v491 = vadd.s32 %v485, 1
        %vm492 = vcmp.gt.s32.totalorder %v491, 0
        %v493 = vsel %vm492, %v491, 0
        %vm494 = vcmp.lt.s32.totalorder %v493, 15
        %v495 = vsel %vm494, %v493, 15
        %vm496 = vcmp.gt.s32.totalorder %v486, 0
        %v497 = vsel %vm496, %v486, 0
        %vm498 = vcmp.lt.s32.totalorder %v497, 7
        %v499 = vsel %vm498, %v497, 7
        %v500 = vadd.s32 %v486, 1
        %vm501 = vcmp.gt.s32.totalorder %v500, 0
        %v502 = vsel %vm501, %v500, 0
        %vm503 = vcmp.lt.s32.totalorder %v502, 7
        %v504 = vsel %vm503, %v502, 7
        %v505 = vmul.u32 %v499, 16
        %v506 = vadd.s32 %v505, %v490
        %v507 = vmul.f32 %v484, %v482
        %v508 = vadd.s32 %v505, %v495
        %v509 = vmul.f32 %v484, %v481
        %v510 = vmul.u32 %v504, 16
        %v511 = vadd.s32 %v510, %v490
        %v512 = vmul.f32 %v483, %v482
        %v513 = vadd.s32 %v510, %v495
        %v514 = vmul.f32 %v483, %v481
        %v515 = vlaneseq
        %v516 = vshrl.u32 %v515, 7
        %v517 = vsub.s32 0, %v516
        %v518 = vrot.slane %v506, %v517
        %vm519 = vcmp.lt.s32.totalorder %v518, 0
        %v520 = vadd.s32 %v518, 128
        %v521 = vsel %vm519, %v520, %v518
        %522 = vset.pattern.permute.xlu0 %v521
        %523 = vperm.xlu0 %522, %v437
        %v524 = vpop.permute.xlu0 %523
        %525 = vset.pattern.permute.xlu0 %v521
        %526 = vperm.xlu0 %525, %v438
        %v527 = vpop.permute.xlu0 %526
        %v528 = vlaneseq
        %v529 = vshrl.u32 %v528, 7
        %v530 = vsub.s32 0, %v529
        %v531 = vrot.slane %v507, %v530
        %v532 = vmul.f32 %v524, %v531
        %v533 = vmul.f32 %v527, %v531
        %v534 = vlaneseq
        %v535 = vshrl.u32 %v534, 7
        %v536 = vsub.s32 0, %v535
        %v537 = vrot.slane %v508, %v536
        %vm538 = vcmp.lt.s32.totalorder %v537, 0
        %v539 = vadd.s32 %v537, 128
        %v540 = vsel %vm538, %v539, %v537
        %541 = vset.pattern.permute.xlu0 %v540
        %542 = vperm.xlu0 %541, %v437
        %v543 = vpop.permute.xlu0 %542
        %544 = vset.pattern.permute.xlu0 %v540
        %545 = vperm.xlu0 %544, %v438
        %v546 = vpop.permute.xlu0 %545
        %v547 = vlaneseq
        %v548 = vshrl.u32 %v547, 7
        %v549 = vsub.s32 0, %v548
        %v550 = vrot.slane %v509, %v549
        %v551 = vmul.f32 %v543, %v550
        %v552 = vmul.f32 %v546, %v550
        %v553 = vadd.f32 %v532, %v551
        %v554 = vadd.f32 %v533, %v552
        %v555 = vlaneseq
        %v556 = vshrl.u32 %v555, 7
        %v557 = vsub.s32 0, %v556
        %v558 = vrot.slane %v511, %v557
        %vm559 = vcmp.lt.s32.totalorder %v558, 0
        %v560 = vadd.s32 %v558, 128
        %v561 = vsel %vm559, %v560, %v558
        %562 = vset.pattern.permute.xlu0 %v561
        %563 = vperm.xlu0 %562, %v437
        %v564 = vpop.permute.xlu0 %563
        %565 = vset.pattern.permute.xlu0 %v561
        %566 = vperm.xlu0 %565, %v438
        %v567 = vpop.permute.xlu0 %566
        %v568 = vlaneseq
        %v569 = vshrl.u32 %v568, 7
        %v570 = vsub.s32 0, %v569
        %v571 = vrot.slane %v512, %v570
        %v572 = vmul.f32 %v564, %v571
        %v573 = vmul.f32 %v567, %v571
        %v574 = vadd.f32 %v553, %v572
        %v575 = vadd.f32 %v554, %v573
        %v576 = vlaneseq
        %v577 = vshrl.u32 %v576, 7
        %v578 = vsub.s32 0, %v577
        %v579 = vrot.slane %v513, %v578
        %vm580 = vcmp.lt.s32.totalorder %v579, 0
        %v581 = vadd.s32 %v579, 128
        %v582 = vsel %vm580, %v581, %v579
        %583 = vset.pattern.permute.xlu0 %v582
        %584 = vperm.xlu0 %583, %v437
        %v585 = vpop.permute.xlu0 %584
        %586 = vset.pattern.permute.xlu0 %v582
        %587 = vperm.xlu0 %586, %v438
        %v588 = vpop.permute.xlu0 %587
        %v589 = vlaneseq
        %v590 = vshrl.u32 %v589, 7
        %v591 = vsub.s32 0, %v590
        %v592 = vrot.slane %v514, %v591
        %v593 = vmul.f32 %v585, %v592
        %v594 = vmul.f32 %v588, %v592
        %v595 = vadd.f32 %v574, %v593
        %v596 = vadd.f32 %v575, %v594
        %597 = vst [vmem:[%s336] sm:$0xff] %v595
        %598 = vst [vmem:[%s336 + $0x20] sm:$0xff] %v596
        %v599 = vld [vmem:[%s3 + $0x1] sm:$0x1]
        %v600 = vld [vmem:[%s4 + $0x1] sm:$0x1]
        %v601 = vlaneseq
        %v602 = vshrl.u32 %v601, 7
        %v603 = vsub.s32 0, %v602
        %v604 = vrot.slane %v599, %v603
        %vm605 = vcmp.lt.s32.totalorder %v604, 0
        %v606 = vadd.s32 %v604, 128
        %v607 = vsel %vm605, %v606, %v604
        %608 = vset.pattern.permute.xlu0 %v607
        %609 = vperm.xlu0 %608, %v432
        %v610 = vpop.permute.xlu0 %609
        %vm611 = vcmp.eq.s32.totalorder %v600, 1
        %v613 = vrot.slane %v610, 1
        %v615 = vsel %vm611, %v613, %v610
        %v616 = vrot.slane %v610, 5
        %v618 = vrot.slane %v610, 4
        %v620 = vsel %vm611, %v616, %v618
        %vm621 = vcmp.eq.s32.totalorder %v600, 2
        %v622 = vrot.slane %v610, 2
        %v624 = vsel %vm621, %v622, %v615
        %v625 = vrot.slane %v610, 6
        %v627 = vsel %vm621, %v625, %v620
        %vm628 = vcmp.eq.s32.totalorder %v600, 3
        %v629 = vrot.slane %v610, 3
        %v631 = vsel %vm628, %v629, %v624
        %v632 = vrot.slane %v610, 7
        %v634 = vsel %vm628, %v632, %v627
        %v635 = vld [vmem:[%s5 + $0x1] sm:$0x1]
        %v636 = vadd.f32 %v635, %v631
        %v637 = vld [vmem:[%s6 + $0x1] sm:$0x1]
        %v638 = vadd.f32 %v637, %v634
        %v639 = vfloor.f32 %v636
        %v640 = vfloor.f32 %v638
        %v641 = vsub.f32 %v636, %v639
        %v642 = vsub.f32 1.0, %v641
        %v643 = vsub.f32 %v638, %v640
        %v644 = vsub.f32 1.0, %v643
        %v645 = vcvt.f32.s32.to.zero.pseudo %v639
        %v646 = vcvt.f32.s32.to.zero.pseudo %v640
        %vm647 = vcmp.gt.s32.totalorder %v645, 0
        %v648 = vsel %vm647, %v645, 0
        %vm649 = vcmp.lt.s32.totalorder %v648, 15
        %v650 = vsel %vm649, %v648, 15
        %v651 = vadd.s32 %v645, 1
        %vm652 = vcmp.gt.s32.totalorder %v651, 0
        %v653 = vsel %vm652, %v651, 0
        %vm654 = vcmp.lt.s32.totalorder %v653, 15
        %v655 = vsel %vm654, %v653, 15
        %vm656 = vcmp.gt.s32.totalorder %v646, 0
        %v657 = vsel %vm656, %v646, 0
        %vm658 = vcmp.lt.s32.totalorder %v657, 7
        %v659 = vsel %vm658, %v657, 7
        %v660 = vadd.s32 %v646, 1
        %vm661 = vcmp.gt.s32.totalorder %v660, 0
        %v662 = vsel %vm661, %v660, 0
        %vm663 = vcmp.lt.s32.totalorder %v662, 7
        %v664 = vsel %vm663, %v662, 7
        %v665 = vmul.u32 %v659, 16
        %v666 = vadd.s32 %v665, %v650
        %v667 = vmul.f32 %v644, %v642
        %v668 = vadd.s32 %v665, %v655
        %v669 = vmul.f32 %v644, %v641
        %v670 = vmul.u32 %v664, 16
        %v671 = vadd.s32 %v670, %v650
        %v672 = vmul.f32 %v643, %v642
        %v673 = vadd.s32 %v670, %v655
        %v674 = vmul.f32 %v643, %v641
        %v675 = vlaneseq
        %v676 = vshrl.u32 %v675, 7
        %v677 = vsub.s32 0, %v676
        %v678 = vrot.slane %v666, %v677
        %vm679 = vcmp.lt.s32.totalorder %v678, 0
        %v680 = vadd.s32 %v678, 128
        %v681 = vsel %vm679, %v680, %v678
        %682 = vset.pattern.permute.xlu0 %v681
        %683 = vperm.xlu0 %682, %v437
        %v684 = vpop.permute.xlu0 %683
        %685 = vset.pattern.permute.xlu0 %v681
        %686 = vperm.xlu0 %685, %v438
        %v687 = vpop.permute.xlu0 %686
        %v688 = vlaneseq
        %v689 = vshrl.u32 %v688, 7
        %v690 = vsub.s32 0, %v689
        %v691 = vrot.slane %v667, %v690
        %v692 = vmul.f32 %v684, %v691
        %v693 = vmul.f32 %v687, %v691
        %v694 = vlaneseq
        %v695 = vshrl.u32 %v694, 7
        %v696 = vsub.s32 0, %v695
        %v697 = vrot.slane %v668, %v696
        %vm698 = vcmp.lt.s32.totalorder %v697, 0
        %v699 = vadd.s32 %v697, 128
        %v700 = vsel %vm698, %v699, %v697
        %701 = vset.pattern.permute.xlu0 %v700
        %702 = vperm.xlu0 %701, %v437
        %v703 = vpop.permute.xlu0 %702
        %704 = vset.pattern.permute.xlu0 %v700
        %705 = vperm.xlu0 %704, %v438
        %v706 = vpop.permute.xlu0 %705
        %v707 = vlaneseq
        %v708 = vshrl.u32 %v707, 7
        %v709 = vsub.s32 0, %v708
        %v710 = vrot.slane %v669, %v709
        %v711 = vmul.f32 %v703, %v710
        %v712 = vmul.f32 %v706, %v710
        %v713 = vadd.f32 %v692, %v711
        %v714 = vadd.f32 %v693, %v712
        %v715 = vlaneseq
        %v716 = vshrl.u32 %v715, 7
        %v717 = vsub.s32 0, %v716
        %v718 = vrot.slane %v671, %v717
        %vm719 = vcmp.lt.s32.totalorder %v718, 0
        %v720 = vadd.s32 %v718, 128
        %v721 = vsel %vm719, %v720, %v718
        %722 = vset.pattern.permute.xlu0 %v721
        %723 = vperm.xlu0 %722, %v437
        %v724 = vpop.permute.xlu0 %723
        %725 = vset.pattern.permute.xlu0 %v721
        %726 = vperm.xlu0 %725, %v438
        %v727 = vpop.permute.xlu0 %726
        %v728 = vlaneseq
        %v729 = vshrl.u32 %v728, 7
        %v730 = vsub.s32 0, %v729
        %v731 = vrot.slane %v672, %v730
        %v732 = vmul.f32 %v724, %v731
        %v733 = vmul.f32 %v727, %v731
        %v734 = vadd.f32 %v713, %v732
        %v735 = vadd.f32 %v714, %v733
        %v736 = vlaneseq
        %v737 = vshrl.u32 %v736, 7
        %v738 = vsub.s32 0, %v737
        %v739 = vrot.slane %v673, %v738
        %vm740 = vcmp.lt.s32.totalorder %v739, 0
        %v741 = vadd.s32 %v739, 128
        %v742 = vsel %vm740, %v741, %v739
        %743 = vset.pattern.permute.xlu0 %v742
        %744 = vperm.xlu0 %743, %v437
        %v745 = vpop.permute.xlu0 %744
        %746 = vset.pattern.permute.xlu0 %v742
        %747 = vperm.xlu0 %746, %v438
        %v748 = vpop.permute.xlu0 %747
        %v749 = vlaneseq
        %v750 = vshrl.u32 %v749, 7
        %v751 = vsub.s32 0, %v750
        %v752 = vrot.slane %v674, %v751
        %v753 = vmul.f32 %v745, %v752
        %v754 = vmul.f32 %v748, %v752
        %v755 = vadd.f32 %v734, %v753
        %v756 = vadd.f32 %v735, %v754
        %757 = vst [vmem:[%s336 + $0x8] sm:$0xff] %v755
        %758 = vst [vmem:[%s336 + $0x28] sm:$0xff] %v756
        %v759 = vld [vmem:[%s3 + $0x2] sm:$0x1]
        %v760 = vld [vmem:[%s4 + $0x2] sm:$0x1]
        %v761 = vlaneseq
        %v762 = vshrl.u32 %v761, 7
        %v763 = vsub.s32 0, %v762
        %v764 = vrot.slane %v759, %v763
        %vm765 = vcmp.lt.s32.totalorder %v764, 0
        %v766 = vadd.s32 %v764, 128
        %v767 = vsel %vm765, %v766, %v764
        %768 = vset.pattern.permute.xlu0 %v767
        %769 = vperm.xlu0 %768, %v432
        %v770 = vpop.permute.xlu0 %769
        %vm771 = vcmp.eq.s32.totalorder %v760, 1
        %v773 = vrot.slane %v770, 1
        %v775 = vsel %vm771, %v773, %v770
        %v776 = vrot.slane %v770, 5
        %v778 = vrot.slane %v770, 4
        %v780 = vsel %vm771, %v776, %v778
        %vm781 = vcmp.eq.s32.totalorder %v760, 2
        %v782 = vrot.slane %v770, 2
        %v784 = vsel %vm781, %v782, %v775
        %v785 = vrot.slane %v770, 6
        %v787 = vsel %vm781, %v785, %v780
        %vm788 = vcmp.eq.s32.totalorder %v760, 3
        %v789 = vrot.slane %v770, 3
        %v791 = vsel %vm788, %v789, %v784
        %v792 = vrot.slane %v770, 7
        %v794 = vsel %vm788, %v792, %v787
        %v795 = vld [vmem:[%s5 + $0x2] sm:$0x1]
        %v796 = vadd.f32 %v795, %v791
        %v797 = vld [vmem:[%s6 + $0x2] sm:$0x1]
        %v798 = vadd.f32 %v797, %v794
        %v799 = vfloor.f32 %v796
        %v800 = vfloor.f32 %v798
        %v801 = vsub.f32 %v796, %v799
        %v802 = vsub.f32 1.0, %v801
        %v803 = vsub.f32 %v798, %v800
        %v804 = vsub.f32 1.0, %v803
        %v805 = vcvt.f32.s32.to.zero.pseudo %v799
        %v806 = vcvt.f32.s32.to.zero.pseudo %v800
        %vm807 = vcmp.gt.s32.totalorder %v805, 0
        %v808 = vsel %vm807, %v805, 0
        %vm809 = vcmp.lt.s32.totalorder %v808, 15
        %v810 = vsel %vm809, %v808, 15
        %v811 = vadd.s32 %v805, 1
        %vm812 = vcmp.gt.s32.totalorder %v811, 0
        %v813 = vsel %vm812, %v811, 0
        %vm814 = vcmp.lt.s32.totalorder %v813, 15
        %v815 = vsel %vm814, %v813, 15
        %vm816 = vcmp.gt.s32.totalorder %v806, 0
        %v817 = vsel %vm816, %v806, 0
        %vm818 = vcmp.lt.s32.totalorder %v817, 7
        %v819 = vsel %vm818, %v817, 7
        %v820 = vadd.s32 %v806, 1
        %vm821 = vcmp.gt.s32.totalorder %v820, 0
        %v822 = vsel %vm821, %v820, 0
        %vm823 = vcmp.lt.s32.totalorder %v822, 7
        %v824 = vsel %vm823, %v822, 7
        %v825 = vmul.u32 %v819, 16
        %v826 = vadd.s32 %v825, %v810
        %v827 = vmul.f32 %v804, %v802
        %v828 = vadd.s32 %v825, %v815
        %v829 = vmul.f32 %v804, %v801
        %v830 = vmul.u32 %v824, 16
        %v831 = vadd.s32 %v830, %v810
        %v832 = vmul.f32 %v803, %v802
        %v833 = vadd.s32 %v830, %v815
        %v834 = vmul.f32 %v803, %v801
        %v835 = vlaneseq
        %v836 = vshrl.u32 %v835, 7
        %v837 = vsub.s32 0, %v836
        %v838 = vrot.slane %v826, %v837
        %vm839 = vcmp.lt.s32.totalorder %v838, 0
        %v840 = vadd.s32 %v838, 128
        %v841 = vsel %vm839, %v840, %v838
        %842 = vset.pattern.permute.xlu0 %v841
        %843 = vperm.xlu0 %842, %v437
        %v844 = vpop.permute.xlu0 %843
        %845 = vset.pattern.permute.xlu0 %v841
        %846 = vperm.xlu0 %845, %v438
        %v847 = vpop.permute.xlu0 %846
        %v848 = vlaneseq
        %v849 = vshrl.u32 %v848, 7
        %v850 = vsub.s32 0, %v849
        %v851 = vrot.slane %v827, %v850
        %v852 = vmul.f32 %v844, %v851
        %v853 = vmul.f32 %v847, %v851
        %v854 = vlaneseq
        %v855 = vshrl.u32 %v854, 7
        %v856 = vsub.s32 0, %v855
        %v857 = vrot.slane %v828, %v856
        %vm858 = vcmp.lt.s32.totalorder %v857, 0
        %v859 = vadd.s32 %v857, 128
        %v860 = vsel %vm858, %v859, %v857
        %861 = vset.pattern.permute.xlu0 %v860
        %862 = vperm.xlu0 %861, %v437
        %v863 = vpop.permute.xlu0 %862
        %864 = vset.pattern.permute.xlu0 %v860
        %865 = vperm.xlu0 %864, %v438
        %v866 = vpop.permute.xlu0 %865
        %v867 = vlaneseq
        %v868 = vshrl.u32 %v867, 7
        %v869 = vsub.s32 0, %v868
        %v870 = vrot.slane %v829, %v869
        %v871 = vmul.f32 %v863, %v870
        %v872 = vmul.f32 %v866, %v870
        %v873 = vadd.f32 %v852, %v871
        %v874 = vadd.f32 %v853, %v872
        %v875 = vlaneseq
        %v876 = vshrl.u32 %v875, 7
        %v877 = vsub.s32 0, %v876
        %v878 = vrot.slane %v831, %v877
        %vm879 = vcmp.lt.s32.totalorder %v878, 0
        %v880 = vadd.s32 %v878, 128
        %v881 = vsel %vm879, %v880, %v878
        %882 = vset.pattern.permute.xlu0 %v881
        %883 = vperm.xlu0 %882, %v437
        %v884 = vpop.permute.xlu0 %883
        %885 = vset.pattern.permute.xlu0 %v881
        %886 = vperm.xlu0 %885, %v438
        %v887 = vpop.permute.xlu0 %886
        %v888 = vlaneseq
        %v889 = vshrl.u32 %v888, 7
        %v890 = vsub.s32 0, %v889
        %v891 = vrot.slane %v832, %v890
        %v892 = vmul.f32 %v884, %v891
        %v893 = vmul.f32 %v887, %v891
        %v894 = vadd.f32 %v873, %v892
        %v895 = vadd.f32 %v874, %v893
        %v896 = vlaneseq
        %v897 = vshrl.u32 %v896, 7
        %v898 = vsub.s32 0, %v897
        %v899 = vrot.slane %v833, %v898
        %vm900 = vcmp.lt.s32.totalorder %v899, 0
        %v901 = vadd.s32 %v899, 128
        %v902 = vsel %vm900, %v901, %v899
        %903 = vset.pattern.permute.xlu0 %v902
        %904 = vperm.xlu0 %903, %v437
        %v905 = vpop.permute.xlu0 %904
        %906 = vset.pattern.permute.xlu0 %v902
        %907 = vperm.xlu0 %906, %v438
        %v908 = vpop.permute.xlu0 %907
        %v909 = vlaneseq
        %v910 = vshrl.u32 %v909, 7
        %v911 = vsub.s32 0, %v910
        %v912 = vrot.slane %v834, %v911
        %v913 = vmul.f32 %v905, %v912
        %v914 = vmul.f32 %v908, %v912
        %v915 = vadd.f32 %v894, %v913
        %v916 = vadd.f32 %v895, %v914
        %917 = vst [vmem:[%s336 + $0x10] sm:$0xff] %v915
        %918 = vst [vmem:[%s336 + $0x30] sm:$0xff] %v916
        %v919 = vld [vmem:[%s3 + $0x3] sm:$0x1]
        %v920 = vld [vmem:[%s4 + $0x3] sm:$0x1]
        %v921 = vlaneseq
        %v922 = vshrl.u32 %v921, 7
        %v923 = vsub.s32 0, %v922
        %v924 = vrot.slane %v919, %v923
        %vm925 = vcmp.lt.s32.totalorder %v924, 0
        %v926 = vadd.s32 %v924, 128
        %v927 = vsel %vm925, %v926, %v924
        %928 = vset.pattern.permute.xlu0 %v927
        %929 = vperm.xlu0 %928, %v432
        %v930 = vpop.permute.xlu0 %929
        %vm931 = vcmp.eq.s32.totalorder %v920, 1
        %v933 = vrot.slane %v930, 1
        %v935 = vsel %vm931, %v933, %v930
        %v936 = vrot.slane %v930, 5
        %v938 = vrot.slane %v930, 4
        %v940 = vsel %vm931, %v936, %v938
        %vm941 = vcmp.eq.s32.totalorder %v920, 2
        %v942 = vrot.slane %v930, 2
        %v944 = vsel %vm941, %v942, %v935
        %v945 = vrot.slane %v930, 6
        %v947 = vsel %vm941, %v945, %v940
        %vm948 = vcmp.eq.s32.totalorder %v920, 3
        %v949 = vrot.slane %v930, 3
        %v951 = vsel %vm948, %v949, %v944
        %v952 = vrot.slane %v930, 7
        %v954 = vsel %vm948, %v952, %v947
        %v955 = vld [vmem:[%s5 + $0x3] sm:$0x1]
        %v956 = vadd.f32 %v955, %v951
        %v957 = vld [vmem:[%s6 + $0x3] sm:$0x1]
        %v958 = vadd.f32 %v957, %v954
        %v959 = vfloor.f32 %v956
        %v960 = vfloor.f32 %v958
        %v961 = vsub.f32 %v956, %v959
        %v962 = vsub.f32 1.0, %v961
        %v963 = vsub.f32 %v958, %v960
        %v964 = vsub.f32 1.0, %v963
        %v965 = vcvt.f32.s32.to.zero.pseudo %v959
        %v966 = vcvt.f32.s32.to.zero.pseudo %v960
        %vm967 = vcmp.gt.s32.totalorder %v965, 0
        %v968 = vsel %vm967, %v965, 0
        %vm969 = vcmp.lt.s32.totalorder %v968, 15
        %v970 = vsel %vm969, %v968, 15
        %v971 = vadd.s32 %v965, 1
        %vm972 = vcmp.gt.s32.totalorder %v971, 0
        %v973 = vsel %vm972, %v971, 0
        %vm974 = vcmp.lt.s32.totalorder %v973, 15
        %v975 = vsel %vm974, %v973, 15
        %vm976 = vcmp.gt.s32.totalorder %v966, 0
        %v977 = vsel %vm976, %v966, 0
        %vm978 = vcmp.lt.s32.totalorder %v977, 7
        %v979 = vsel %vm978, %v977, 7
        %v980 = vadd.s32 %v966, 1
        %vm981 = vcmp.gt.s32.totalorder %v980, 0
        %v982 = vsel %vm981, %v980, 0
        %vm983 = vcmp.lt.s32.totalorder %v982, 7
        %v984 = vsel %vm983, %v982, 7
        %v985 = vmul.u32 %v979, 16
        %v986 = vadd.s32 %v985, %v970
        %v987 = vmul.f32 %v964, %v962
        %v988 = vadd.s32 %v985, %v975
        %v989 = vmul.f32 %v964, %v961
        %v990 = vmul.u32 %v984, 16
        %v991 = vadd.s32 %v990, %v970
        %v992 = vmul.f32 %v963, %v962
        %v993 = vadd.s32 %v990, %v975
        %v994 = vmul.f32 %v963, %v961
        %v995 = vlaneseq
        %v996 = vshrl.u32 %v995, 7
        %v997 = vsub.s32 0, %v996
        %v998 = vrot.slane %v986, %v997
        %vm999 = vcmp.lt.s32.totalorder %v998, 0
        %v1000 = vadd.s32 %v998, 128
        %v1001 = vsel %vm999, %v1000, %v998
        %1002 = vset.pattern.permute.xlu0 %v1001
        %1003 = vperm.xlu0 %1002, %v437
        %v1004 = vpop.permute.xlu0 %1003
        %1005 = vset.pattern.permute.xlu0 %v1001
        %1006 = vperm.xlu0 %1005, %v438
        %v1007 = vpop.permute.xlu0 %1006
        %v1008 = vlaneseq
        %v1009 = vshrl.u32 %v1008, 7
        %v1010 = vsub.s32 0, %v1009
        %v1011 = vrot.slane %v987, %v1010
        %v1012 = vmul.f32 %v1004, %v1011
        %v1013 = vmul.f32 %v1007, %v1011
        %v1014 = vlaneseq
        %v1015 = vshrl.u32 %v1014, 7
        %v1016 = vsub.s32 0, %v1015
        %v1017 = vrot.slane %v988, %v1016
        %vm1018 = vcmp.lt.s32.totalorder %v1017, 0
        %v1019 = vadd.s32 %v1017, 128
        %v1020 = vsel %vm1018, %v1019, %v1017
        %1021 = vset.pattern.permute.xlu0 %v1020
        %1022 = vperm.xlu0 %1021, %v437
        %v1023 = vpop.permute.xlu0 %1022
        %1024 = vset.pattern.permute.xlu0 %v1020
        %1025 = vperm.xlu0 %1024, %v438
        %v1026 = vpop.permute.xlu0 %1025
        %v1027 = vlaneseq
        %v1028 = vshrl.u32 %v1027, 7
        %v1029 = vsub.s32 0, %v1028
        %v1030 = vrot.slane %v989, %v1029
        %v1031 = vmul.f32 %v1023, %v1030
        %v1032 = vmul.f32 %v1026, %v1030
        %v1033 = vadd.f32 %v1012, %v1031
        %v1034 = vadd.f32 %v1013, %v1032
        %v1035 = vlaneseq
        %v1036 = vshrl.u32 %v1035, 7
        %v1037 = vsub.s32 0, %v1036
        %v1038 = vrot.slane %v991, %v1037
        %vm1039 = vcmp.lt.s32.totalorder %v1038, 0
        %v1040 = vadd.s32 %v1038, 128
        %v1041 = vsel %vm1039, %v1040, %v1038
        %1042 = vset.pattern.permute.xlu0 %v1041
        %1043 = vperm.xlu0 %1042, %v437
        %v1044 = vpop.permute.xlu0 %1043
        %1045 = vset.pattern.permute.xlu0 %v1041
        %1046 = vperm.xlu0 %1045, %v438
        %v1047 = vpop.permute.xlu0 %1046
        %v1048 = vlaneseq
        %v1049 = vshrl.u32 %v1048, 7
        %v1050 = vsub.s32 0, %v1049
        %v1051 = vrot.slane %v992, %v1050
        %v1052 = vmul.f32 %v1044, %v1051
        %v1053 = vmul.f32 %v1047, %v1051
        %v1054 = vadd.f32 %v1033, %v1052
        %v1055 = vadd.f32 %v1034, %v1053
        %v1056 = vlaneseq
        %v1057 = vshrl.u32 %v1056, 7
        %v1058 = vsub.s32 0, %v1057
        %v1059 = vrot.slane %v993, %v1058
        %vm1060 = vcmp.lt.s32.totalorder %v1059, 0
        %v1061 = vadd.s32 %v1059, 128
        %v1062 = vsel %vm1060, %v1061, %v1059
        %1063 = vset.pattern.permute.xlu0 %v1062
        %1064 = vperm.xlu0 %1063, %v437
        %v1065 = vpop.permute.xlu0 %1064
        %1066 = vset.pattern.permute.xlu0 %v1062
        %1067 = vperm.xlu0 %1066, %v438
        %v1068 = vpop.permute.xlu0 %1067
        %v1069 = vlaneseq
        %v1070 = vshrl.u32 %v1069, 7
        %v1071 = vsub.s32 0, %v1070
        %v1072 = vrot.slane %v994, %v1071
        %v1073 = vmul.f32 %v1065, %v1072
        %v1074 = vmul.f32 %v1068, %v1072
        %v1075 = vadd.f32 %v1054, %v1073
        %v1076 = vadd.f32 %v1055, %v1074
        %1077 = vst [vmem:[%s336 + $0x18] sm:$0xff] %v1075
        %1078 = vst [vmem:[%s336 + $0x38] sm:$0xff] %v1076
        %s1079 = sand.u32 %s208, 1
        %s1080 = scalar_lea.sflag [#allocation4], %s1079
        %s1081 = sand.u32 %s208, 1
        %s1082 = smul.addr %s1081, 64
        %s1083 = scalar_lea.vmem [#allocation5], %s1082
        // Predicated region
        $region53: #{tpu_custom_call.1} parent=47 // pred_check
          %p1084 = pneg %p218
        $region54: #{tpu_custom_call.1} parent=47 // pred_check_branch
          %1086 = sbr.rel (%p1084) target = $region56
        $region55: #{tpu_custom_call.1} parent=47 // pred_region
          %s1087 = smul.u32 2, %s29
          %s1089 = ssub.s32 1024, 1024
          %1090 = vsyncadd %s1080, %s1089
          %s1091 = smul.addr %s1087, 4
          %s1092 = smul.addr %s28, 32
          %s1093 = sadd.s32 %s1091, %s1092
          %s1094 = smul.addr %s1093, 128
          %s1095 = scalar_lea.hbm %s7, %s1094
          %s1096 = sshll.u32 %s1083, 4
          %s1097 = int_to_ptr.vmem [resolvable:$true] %s1096
          %1102 = dma.vmem_to_hbm [thread:$0]  %s1097, 1024, %s1095, %s1080, 512, 512, 32
        $region56: #{tpu_custom_call.1} parent=47 // pred_fallthru
          _
      $region48: #{tpu_custom_call.1} parent=5 // pred_fallthru
        _
      %p1103 = scmp.le.s32.totalorder 2, %s19
      // Predicated region
      $region57: #{tpu_custom_call.1} parent=5 // pred_check
        %p1104 = pneg %p1103
      $region58: #{tpu_custom_call.1} parent=5 // pred_check_branch
        %1106 = sbr.rel (%p1104) target = $region60
      $region59: #{tpu_custom_call.1} parent=5 // pred_region
        %s1107 = ssub.s32 %s19, 2
        // Predicated region
        $region61: #{tpu_custom_call.1} parent=59 // pred_check
          %p1108 = pneg %p224
        $region62: #{tpu_custom_call.1} parent=59 // pred_check_branch
          %1110 = sbr.rel (%p1108) target = $region64
        $region63: #{tpu_custom_call.1} parent=59 // pred_region
          %s1111 = sand.u32 %s209, 1
          %s1112 = scalar_lea.sflag [#allocation4], %s1111
          %s1113 = sand.u32 %s209, 1
          %s1114 = smul.addr %s1113, 64
          %s1115 = scalar_lea.vmem [#allocation5], %s1114
          %1116 = dma.done %s1112, 1024
        $region64: #{tpu_custom_call.1} parent=59 // pred_fallthru
          _
      $region60: #{tpu_custom_call.1} parent=5 // pred_fallthru
        _
    $region6: #{tpu_custom_call.1} parent=1 // loop_footer
      %s23 = sadd.s32 1, %s19
    $region7: #{tpu_custom_call.1} parent=1 // loop_footer_branch
      %18 = sbr.rel target = $region3
    $region8: #{tpu_custom_call.1} parent=1 // loop_exit
      _
    %1117 = vsyncpa [#allocation3], 1
    %s1118 = scalar_lea.sflag [#allocation3], 1
    %1119 = vsyncpa %s1118, 1
    %1120 = vsyncpa [#allocation4], 1
    %s1121 = scalar_lea.sflag [#allocation4], 1
    %1122 = vsyncpa %s1121, 1

</llo_original>
